<compile_context>
chip_gen: v7x
topology: tpu7x:2x2x1
jax: 0.10.0
libtpu: 0.0.40
codegen_flags: <defaults>
</compile_context>

<pallas_src>
import functools
import math

import jax
import jax.numpy as jnp
from jax import lax
from jax.experimental import pallas as pl
from jax.experimental.pallas import tpu as pltpu


def _mha_kernel(x_ref, cw_ref, posc_ref, wqkv_ref, wfc_ref, out_ref,
                *, n_heads, head_dim, bt, out_pad):
    E = head_dim
    HE = n_heads * E
    S = posc_ref.shape[0]

    for b in range(bt):                                   # static, small Bt
        # ---- positional encoding, all heads stacked along the lane axis ----
        # posc already contains conv-bias + pos, and (cls + pos) in row 0.
        xcol = x_ref[b]                                   # (S, 1)
        enc = xcol * cw_ref[...] + posc_ref[...]          # (S, HE)

        # ---- fused Q/K/V projection: one MXU matmul, block-diagonal weights.
        # 1/sqrt(E) already folded into the Wq blocks (wrapper, trace-time).
        qkv = jnp.dot(enc, wqkv_ref[...],
                      preferred_element_type=jnp.float32)  # (S, 3HE)

        # ---- per-head diagonal-softmax weights; qh/kh live one iteration ----
        parts = []
        for h in range(n_heads):                          # n_heads small/static
            qh = qkv[:, h * E:(h + 1) * E]
            kh = qkv[:, HE + h * E:HE + (h + 1) * E]
            scores = lax.dot_general(qh, kh, (((1,), (1,)), ((), ())),
                                     preferred_element_type=jnp.float32)  # (S,S)
            m = jnp.max(scores, axis=-1, keepdims=True)                   # (S,1)
            denom = jnp.sum(jnp.exp(scores - m), axis=-1, keepdims=True)  # (S,1)
            diag_s = jnp.sum(qh * kh, axis=-1, keepdims=True)             # (S,1)
            diag = jnp.exp(diag_s - m) * pl.reciprocal(denom, approx=True)
            parts.append(jnp.broadcast_to(diag, (S, E)))

        # ---- lane-dense accumulate + head-mean + fc (K = HE contraction) ----
        diag_full = jnp.concatenate(parts, axis=-1)        # (S, HE)
        acc_full = diag_full * qkv[:, 2 * HE:3 * HE]       # (S, HE)
        mha = jnp.dot(acc_full, wfc_ref[...],
                      preferred_element_type=jnp.float32)  # (S, E)
        skip = enc[:, (n_heads - 1) * E:]                  # last head's encoding

        # ---- single lane-dense packed store: [mha | skip | zero pad] --------
        pieces = [mha, skip]
        if out_pad:
            pieces.append(jnp.zeros((S, out_pad), jnp.float32))
        out_ref[b] = jnp.concatenate(pieces, axis=-1).astype(out_ref.dtype)


@jax.jit
def multi_headed_attention(x_nchw, conv_w, conv_b, cls_tok, pos, wq, wk, wv, wfc):
    B = x_nchw.shape[0]
    n_heads, S, E = pos.shape
    HE = n_heads * E

    # lane-dense output width: multiple of 128, >= 2E
    out_w = -(-max(2 * E, 128) // 128) * 128
    out_pad = out_w - 2 * E

    # glue: flatten spatial dims, prepend a zero row as the cls slot -> (B, S, 1)
    x_flat = x_nchw.reshape(B, -1).astype(jnp.float32)
    x_seq = jnp.concatenate(
        [jnp.zeros((B, 1), x_flat.dtype), x_flat], axis=1)[..., None]

    # batch blocking: keep >= 2 grid steps when B allows (v7x has 2 TCs),
    # cap Bt so double-buffered in/out blocks stay tiny in VMEM (v7x: 64 MiB).
    max_bt = 8
    grid_steps = 2 if B >= 2 else 1
    bt = min(max(1, -(-B // grid_steps)), max_bt)
    grid_steps = -(-B // bt)
    b_pad = grid_steps * bt
    if b_pad != B:
        x_seq = jnp.concatenate(
            [x_seq, jnp.zeros((b_pad - B, S, 1), x_seq.dtype)], axis=0)

    # glue: stack heads along the lane axis
    cw_all = conv_w.reshape(1, HE)                             # (1, HE)
    cb_all = conv_b.reshape(1, HE)                             # (1, HE)
    cls_all = cls_tok.reshape(1, HE)                           # (1, HE)
    pos_all = jnp.transpose(pos, (1, 0, 2)).reshape(S, HE)     # (S, HE)

    # fold conv bias into pos; fold cls token into row 0 (x row 0 is zero)
    posc = pos_all + cb_all
    posc = posc.at[0].set(pos_all[0] + cls_all[0])

    # glue: block-diagonal fused QKV weight, (in, out) layout.
    # 1/sqrt(E) folded into Wq here (trace-time constant work under jit).
    def block_diag(w):  # w: (n_heads, out, in) PyTorch Linear layout
        w_t = jnp.swapaxes(w, -1, -2)                          # (H, E_in, E_out)
        eye = jnp.eye(n_heads, dtype=w_t.dtype)
        return jnp.einsum('hg,hij->higj', eye, w_t).reshape(HE, HE)

    wqkv = jnp.concatenate(
        [block_diag(wq / math.sqrt(E)), block_diag(wk), block_diag(wv)],
        axis=1)                                                # (HE, 3HE)

    # fc weight tiled vertically to (HE, E) so the fc contraction is K = HE;
    # the 1/n_heads head-mean is folded in.
    wfc_stacked = jnp.tile(wfc.T / n_heads, (n_heads, 1)).astype(jnp.float32)

    kernel = functools.partial(_mha_kernel, n_heads=n_heads, head_dim=E,
                               bt=bt, out_pad=out_pad)

    out_packed = pl.pallas_call(
        kernel,
        out_shape=jax.ShapeDtypeStruct((b_pad, S, out_w), jnp.float32),
        grid_spec=pltpu.PrefetchScalarGridSpec(
            num_scalar_prefetch=0,
            grid=(grid_steps,),
            in_specs=[
                pl.BlockSpec((bt, S, 1), lambda g: (g, 0, 0)),        # x_seq
                pl.BlockSpec((1, HE), lambda g: (0, 0)),              # conv weight
                pl.BlockSpec((S, HE), lambda g: (0, 0)),              # pos (+cb/cls)
                pl.BlockSpec((HE, 3 * HE), lambda g: (0, 0)),         # fused Wqkv
                pl.BlockSpec((HE, E), lambda g: (0, 0)),              # tiled Wfc
            ],
            out_specs=pl.BlockSpec((bt, S, out_w), lambda g: (g, 0, 0)),
        ),
        compiler_params=pltpu.CompilerParams(
            dimension_semantics=("parallel",)),
    )(x_seq, cw_all, posc, wqkv, wfc_stacked)

    mha = out_packed[:B, :, :E]
    skip = out_packed[:B, :, E:2 * E]
    return mha, skip


def reference(x_nchw, conv_w, conv_b, cls_tok, pos, wq, wk, wv, wfc):
    """Pure-JAX mirror of the PyTorch forward pass."""
    B = x_nchw.shape[0]
    n_heads, S, E = pos.shape
    x_flat = x_nchw.reshape(B, -1)
    attn_vals = []
    skip = None
    for h in range(n_heads):
        pix = (x_flat[:, :, None] * conv_w[h, 0][None, None, :]
               + conv_b[h, 0][None, None, :])                       # (B, HW, E)
        cls = jnp.broadcast_to(cls_tok[h, 0][None, None, :], (B, 1, E))
        enc = jnp.concatenate([cls, pix], axis=1) + pos[h][None]    # (B, S, E)
        q = enc @ wq[h].T
        k = enc @ wk[h].T
        v = enc @ wv[h].T
        scores = jnp.einsum('bud,bvd->buv', q, k) / math.sqrt(E)
        p = jax.nn.softmax(scores, axis=-1)
        diag = jnp.einsum('buu->bu', p)
        attn_vals.append(diag[..., None] * v)
        skip = enc
    mha = jnp.stack(attn_vals).mean(axis=0) @ wfc.T
    return mha, skip


if __name__ == "__main__":
    B, H, W, E, n_heads = 2, 8, 8, 32, 4
    S = 1 + H * W

    key = jax.random.PRNGKey(0)
    ks = jax.random.split(key, 9)
    x = jax.random.normal(ks[0], (B, 1, H, W), jnp.float32)
    conv_w = 0.2 * jax.random.normal(ks[1], (n_heads, 1, E), jnp.float32)
    conv_b = 0.2 * jax.random.normal(ks[2], (n_heads, 1, E), jnp.float32)
    cls_tok = 0.2 * jax.random.normal(ks[3], (n_heads, 1, E), jnp.float32)
    pos = 0.2 * jax.random.normal(ks[4], (n_heads, S, E), jnp.float32)
    wq = 0.2 * jax.random.normal(ks[5], (n_heads, E, E), jnp.float32)
    wk = 0.2 * jax.random.normal(ks[6], (n_heads, E, E), jnp.float32)
    wv = 0.2 * jax.random.normal(ks[7], (n_heads, E, E), jnp.float32)
    wfc = 0.2 * jax.random.normal(ks[8], (E, E), jnp.float32)

    mha_out, skip_val = multi_headed_attention(
        x, conv_w, conv_b, cls_tok, pos, wq, wk, wv, wfc)
    jax.block_until_ready((mha_out, skip_val))

    ref_out, ref_skip = reference(x, conv_w, conv_b, cls_tok, pos, wq, wk, wv, wfc)
    assert mha_out.shape == (B, S, E) and skip_val.shape == (B, S, E)
    assert jnp.allclose(mha_out, ref_out, rtol=1e-3, atol=1e-3), "mha mismatch"
    assert jnp.allclose(skip_val, ref_skip, rtol=1e-3, atol=1e-3), "skip mismatch"
    print("KERNEL_OK")
</pallas_src>

<mosaic_0001>
module attributes {stable_mosaic.version = 11 : i64} {
  func.func @_mha_kernel(%arg0: i32, %arg1: memref<1x65x1xf32, #tpu.memory_space<vmem>>, %arg2: memref<1x128xf32, #tpu.memory_space<vmem>>, %arg3: memref<65x128xf32, #tpu.memory_space<vmem>>, %arg4: memref<128x384xf32, #tpu.memory_space<vmem>>, %arg5: memref<128x32xf32, #tpu.memory_space<vmem>>, %arg6: memref<1x65x128xf32, #tpu.memory_space<vmem>>) attributes {dimension_semantics = [#tpu.dimension_semantics<parallel>], iteration_bounds = array<i64: 2>, scalar_prefetch = 0 : i64, scratch_operands = 0 : i64, tpu.core_type = #tpu.core_type<tc>, window_params = [{transform_indices = @transform_0, window_bounds = array<i64: 1, 65, 1>}, {pipeline_mode = #tpu.pipeline_mode<synchronous>, transform_indices = @transform_1, window_bounds = array<i64: 1, 128>}, {pipeline_mode = #tpu.pipeline_mode<synchronous>, transform_indices = @transform_2, window_bounds = array<i64: 65, 128>}, {pipeline_mode = #tpu.pipeline_mode<synchronous>, transform_indices = @transform_3, window_bounds = array<i64: 128, 384>}, {pipeline_mode = #tpu.pipeline_mode<synchronous>, transform_indices = @transform_4, window_bounds = array<i64: 128, 32>}, {transform_indices = @transform_5, window_bounds = array<i64: 1, 65, 128>}]} {
    %c0 = arith.constant 0 : index
    %c0_0 = arith.constant 0 : index
    %c0_1 = arith.constant 0 : index
    %0 = vector.load %arg1[%c0, %c0_0, %c0_1] : memref<1x65x1xf32, #tpu.memory_space<vmem>>, vector<1x65x1xf32>
    %1 = vector.shape_cast %0 : vector<1x65x1xf32> to vector<65x1xf32>
    %c0_2 = arith.constant 0 : index
    %c0_3 = arith.constant 0 : index
    %2 = vector.load %arg2[%c0_2, %c0_3] : memref<1x128xf32, #tpu.memory_space<vmem>>, vector<1x128xf32>
    %3 = vector.broadcast %1 : vector<65x1xf32> to vector<65x128xf32>
    %4 = vector.broadcast %2 : vector<1x128xf32> to vector<65x128xf32>
    %5 = arith.mulf %3, %4 : vector<65x128xf32>
    %c0_4 = arith.constant 0 : index
    %c0_5 = arith.constant 0 : index
    %6 = vector.load %arg3[%c0_4, %c0_5] : memref<65x128xf32, #tpu.memory_space<vmem>>, vector<65x128xf32>
    %7 = arith.addf %5, %6 : vector<65x128xf32>
    %c0_6 = arith.constant 0 : index
    %c0_7 = arith.constant 0 : index
    %8 = vector.load %arg4[%c0_6, %c0_7] : memref<128x384xf32, #tpu.memory_space<vmem>>, vector<128x384xf32>
    %cst = arith.constant dense<0.000000e+00> : vector<65x384xf32>
    %9 = tpu.matmul %7, %8, %cst {dimension_numbers = #tpu.dot_dimension_numbers<[1], [0], [0], [1], [0, 0, 1, 1], [], []>} : vector<65x128xf32>, vector<128x384xf32>, vector<65x384xf32> -> vector<65x384xf32>
    %10 = vector.extract_strided_slice %9 {offsets = [0, 0], sizes = [65, 32], strides = [1, 1]} : vector<65x384xf32> to vector<65x32xf32>
    %11 = vector.extract_strided_slice %9 {offsets = [0, 128], sizes = [65, 32], strides = [1, 1]} : vector<65x384xf32> to vector<65x32xf32>
    %cst_8 = arith.constant dense<0.000000e+00> : vector<65x65xf32>
    %12 = tpu.matmul %10, %11, %cst_8 {dimension_numbers = #tpu.dot_dimension_numbers<[1], [1], [0], [0], [0, 0, 1, 0], [], []>} : vector<65x32xf32>, vector<65x32xf32>, vector<65x65xf32> -> vector<65x65xf32>
    %cst_9 = arith.constant dense<0xFF800000> : vector<65xf32>
    %13 = vector.multi_reduction <maximumf>, %12, %cst_9 [1] : vector<65x65xf32> to vector<65xf32>
    %14 = vector.shape_cast %13 : vector<65xf32> to vector<65x1xf32>
    %15 = vector.broadcast %14 : vector<65x1xf32> to vector<65x65xf32>
    %16 = arith.subf %12, %15 : vector<65x65xf32>
    %17 = math.exp %16 : vector<65x65xf32>
    %cst_10 = arith.constant dense<0.000000e+00> : vector<65xf32>
    %18 = vector.multi_reduction <add>, %17, %cst_10 [1] : vector<65x65xf32> to vector<65xf32>
    %19 = vector.shape_cast %18 : vector<65xf32> to vector<65x1xf32>
    %20 = arith.mulf %10, %11 : vector<65x32xf32>
    %cst_11 = arith.constant dense<0.000000e+00> : vector<65xf32>
    %21 = vector.multi_reduction <add>, %20, %cst_11 [1] : vector<65x32xf32> to vector<65xf32>
    %22 = vector.shape_cast %21 : vector<65xf32> to vector<65x1xf32>
    %23 = arith.subf %22, %14 : vector<65x1xf32>
    %24 = math.exp %23 : vector<65x1xf32>
    %25 = tpu.reciprocal %19 {approx = true} : vector<65x1xf32> -> vector<65x1xf32>
    %26 = arith.mulf %24, %25 : vector<65x1xf32>
    %27 = vector.shape_cast %26 : vector<65x1xf32> to vector<65x1xf32>
    %28 = vector.broadcast %27 : vector<65x1xf32> to vector<65x32xf32>
    %29 = vector.extract_strided_slice %9 {offsets = [0, 32], sizes = [65, 32], strides = [1, 1]} : vector<65x384xf32> to vector<65x32xf32>
    %30 = vector.extract_strided_slice %9 {offsets = [0, 160], sizes = [65, 32], strides = [1, 1]} : vector<65x384xf32> to vector<65x32xf32>
    %cst_12 = arith.constant dense<0.000000e+00> : vector<65x65xf32>
    %31 = tpu.matmul %29, %30, %cst_12 {dimension_numbers = #tpu.dot_dimension_numbers<[1], [1], [0], [0], [0, 0, 1, 0], [], []>} : vector<65x32xf32>, vector<65x32xf32>, vector<65x65xf32> -> vector<65x65xf32>
    %cst_13 = arith.constant dense<0xFF800000> : vector<65xf32>
    %32 = vector.multi_reduction <maximumf>, %31, %cst_13 [1] : vector<65x65xf32> to vector<65xf32>
    %33 = vector.shape_cast %32 : vector<65xf32> to vector<65x1xf32>
    %34 = vector.broadcast %33 : vector<65x1xf32> to vector<65x65xf32>
    %35 = arith.subf %31, %34 : vector<65x65xf32>
    %36 = math.exp %35 : vector<65x65xf32>
    %cst_14 = arith.constant dense<0.000000e+00> : vector<65xf32>
    %37 = vector.multi_reduction <add>, %36, %cst_14 [1] : vector<65x65xf32> to vector<65xf32>
    %38 = vector.shape_cast %37 : vector<65xf32> to vector<65x1xf32>
    %39 = arith.mulf %29, %30 : vector<65x32xf32>
    %cst_15 = arith.constant dense<0.000000e+00> : vector<65xf32>
    %40 = vector.multi_reduction <add>, %39, %cst_15 [1] : vector<65x32xf32> to vector<65xf32>
    %41 = vector.shape_cast %40 : vector<65xf32> to vector<65x1xf32>
    %42 = arith.subf %41, %33 : vector<65x1xf32>
    %43 = math.exp %42 : vector<65x1xf32>
    %44 = tpu.reciprocal %38 {approx = true} : vector<65x1xf32> -> vector<65x1xf32>
    %45 = arith.mulf %43, %44 : vector<65x1xf32>
    %46 = vector.shape_cast %45 : vector<65x1xf32> to vector<65x1xf32>
    %47 = vector.broadcast %46 : vector<65x1xf32> to vector<65x32xf32>
    %48 = vector.extract_strided_slice %9 {offsets = [0, 64], sizes = [65, 32], strides = [1, 1]} : vector<65x384xf32> to vector<65x32xf32>
    %49 = vector.extract_strided_slice %9 {offsets = [0, 192], sizes = [65, 32], strides = [1, 1]} : vector<65x384xf32> to vector<65x32xf32>
    %cst_16 = arith.constant dense<0.000000e+00> : vector<65x65xf32>
    %50 = tpu.matmul %48, %49, %cst_16 {dimension_numbers = #tpu.dot_dimension_numbers<[1], [1], [0], [0], [0, 0, 1, 0], [], []>} : vector<65x32xf32>, vector<65x32xf32>, vector<65x65xf32> -> vector<65x65xf32>
    %cst_17 = arith.constant dense<0xFF800000> : vector<65xf32>
    %51 = vector.multi_reduction <maximumf>, %50, %cst_17 [1] : vector<65x65xf32> to vector<65xf32>
    %52 = vector.shape_cast %51 : vector<65xf32> to vector<65x1xf32>
    %53 = vector.broadcast %52 : vector<65x1xf32> to vector<65x65xf32>
    %54 = arith.subf %50, %53 : vector<65x65xf32>
    %55 = math.exp %54 : vector<65x65xf32>
    %cst_18 = arith.constant dense<0.000000e+00> : vector<65xf32>
    %56 = vector.multi_reduction <add>, %55, %cst_18 [1] : vector<65x65xf32> to vector<65xf32>
    %57 = vector.shape_cast %56 : vector<65xf32> to vector<65x1xf32>
    %58 = arith.mulf %48, %49 : vector<65x32xf32>
    %cst_19 = arith.constant dense<0.000000e+00> : vector<65xf32>
    %59 = vector.multi_reduction <add>, %58, %cst_19 [1] : vector<65x32xf32> to vector<65xf32>
    %60 = vector.shape_cast %59 : vector<65xf32> to vector<65x1xf32>
    %61 = arith.subf %60, %52 : vector<65x1xf32>
    %62 = math.exp %61 : vector<65x1xf32>
    %63 = tpu.reciprocal %57 {approx = true} : vector<65x1xf32> -> vector<65x1xf32>
    %64 = arith.mulf %62, %63 : vector<65x1xf32>
    %65 = vector.shape_cast %64 : vector<65x1xf32> to vector<65x1xf32>
    %66 = vector.broadcast %65 : vector<65x1xf32> to vector<65x32xf32>
    %67 = vector.extract_strided_slice %9 {offsets = [0, 96], sizes = [65, 32], strides = [1, 1]} : vector<65x384xf32> to vector<65x32xf32>
    %68 = vector.extract_strided_slice %9 {offsets = [0, 224], sizes = [65, 32], strides = [1, 1]} : vector<65x384xf32> to vector<65x32xf32>
    %cst_20 = arith.constant dense<0.000000e+00> : vector<65x65xf32>
    %69 = tpu.matmul %67, %68, %cst_20 {dimension_numbers = #tpu.dot_dimension_numbers<[1], [1], [0], [0], [0, 0, 1, 0], [], []>} : vector<65x32xf32>, vector<65x32xf32>, vector<65x65xf32> -> vector<65x65xf32>
    %cst_21 = arith.constant dense<0xFF800000> : vector<65xf32>
    %70 = vector.multi_reduction <maximumf>, %69, %cst_21 [1] : vector<65x65xf32> to vector<65xf32>
    %71 = vector.shape_cast %70 : vector<65xf32> to vector<65x1xf32>
    %72 = vector.broadcast %71 : vector<65x1xf32> to vector<65x65xf32>
    %73 = arith.subf %69, %72 : vector<65x65xf32>
    %74 = math.exp %73 : vector<65x65xf32>
    %cst_22 = arith.constant dense<0.000000e+00> : vector<65xf32>
    %75 = vector.multi_reduction <add>, %74, %cst_22 [1] : vector<65x65xf32> to vector<65xf32>
    %76 = vector.shape_cast %75 : vector<65xf32> to vector<65x1xf32>
    %77 = arith.mulf %67, %68 : vector<65x32xf32>
    %cst_23 = arith.constant dense<0.000000e+00> : vector<65xf32>
    %78 = vector.multi_reduction <add>, %77, %cst_23 [1] : vector<65x32xf32> to vector<65xf32>
    %79 = vector.shape_cast %78 : vector<65xf32> to vector<65x1xf32>
    %80 = arith.subf %79, %71 : vector<65x1xf32>
    %81 = math.exp %80 : vector<65x1xf32>
    %82 = tpu.reciprocal %76 {approx = true} : vector<65x1xf32> -> vector<65x1xf32>
    %83 = arith.mulf %81, %82 : vector<65x1xf32>
    %84 = vector.shape_cast %83 : vector<65x1xf32> to vector<65x1xf32>
    %85 = vector.broadcast %84 : vector<65x1xf32> to vector<65x32xf32>
    %86 = tpu.concatenate %28, %47, %66, %85 in 1 : vector<65x32xf32>, vector<65x32xf32>, vector<65x32xf32>, vector<65x32xf32> -> vector<65x128xf32>
    %87 = vector.extract_strided_slice %9 {offsets = [0, 256], sizes = [65, 128], strides = [1, 1]} : vector<65x384xf32> to vector<65x128xf32>
    %88 = arith.mulf %86, %87 : vector<65x128xf32>
    %c0_24 = arith.constant 0 : index
    %c0_25 = arith.constant 0 : index
    %89 = vector.load %arg5[%c0_24, %c0_25] : memref<128x32xf32, #tpu.memory_space<vmem>>, vector<128x32xf32>
    %cst_26 = arith.constant dense<0.000000e+00> : vector<65x32xf32>
    %90 = tpu.matmul %88, %89, %cst_26 {dimension_numbers = #tpu.dot_dimension_numbers<[1], [0], [0], [1], [0, 0, 1, 1], [], []>} : vector<65x128xf32>, vector<128x32xf32>, vector<65x32xf32> -> vector<65x32xf32>
    %91 = vector.extract_strided_slice %7 {offsets = [0, 96], sizes = [65, 32], strides = [1, 1]} : vector<65x128xf32> to vector<65x32xf32>
    %cst_27 = arith.constant 0.000000e+00 : f32
    %92 = vector.broadcast %cst_27 : f32 to vector<65x64xf32>
    %93 = tpu.concatenate %90, %91, %92 in 1 : vector<65x32xf32>, vector<65x32xf32>, vector<65x64xf32> -> vector<65x128xf32>
    %c0_28 = arith.constant 0 : index
    %c0_29 = arith.constant 0 : index
    %c0_30 = arith.constant 0 : index
    %94 = vector.load %arg6[%c0_28, %c0_29, %c0_30] : memref<1x65x128xf32, #tpu.memory_space<vmem>>, vector<1x65x128xf32>
    %95 = vector.shape_cast %94 : vector<1x65x128xf32> to vector<65x128xf32>
    %96 = vector.shape_cast %93 : vector<65x128xf32> to vector<1x65x128xf32>
    tpu.vector_store %arg6[%c0_28, %c0_29, %c0_30], %96 {strides = array<i32>} : memref<1x65x128xf32, #tpu.memory_space<vmem>>, vector<1x65x128xf32>,
    return
  }
  func.func @transform_0(%arg0: i32) -> (i32, i32, i32) {
    %c0_i32 = arith.constant 0 : i32
    %c0_i32_0 = arith.constant 0 : i32
    %c0_i32_1 = arith.constant 0 : i32
    return %arg0, %c0_i32, %c0_i32_0 : i32, i32, i32
  }
  func.func @transform_1(%arg0: i32) -> (i32, i32) {
    %c0_i32 = arith.constant 0 : i32
    %c0_i32_0 = arith.constant 0 : i32
    %c0_i32_1 = arith.constant 0 : i32
    return %c0_i32, %c0_i32_0 : i32, i32
  }
  func.func @transform_2(%arg0: i32) -> (i32, i32) {
    %c0_i32 = arith.constant 0 : i32
    %c0_i32_0 = arith.constant 0 : i32
    %c0_i32_1 = arith.constant 0 : i32
    return %c0_i32, %c0_i32_0 : i32, i32
  }
  func.func @transform_3(%arg0: i32) -> (i32, i32) {
    %c0_i32 = arith.constant 0 : i32
    %c0_i32_0 = arith.constant 0 : i32
    %c0_i32_1 = arith.constant 0 : i32
    return %c0_i32, %c0_i32_0 : i32, i32
  }
  func.func @transform_4(%arg0: i32) -> (i32, i32) {
    %c0_i32 = arith.constant 0 : i32
    %c0_i32_0 = arith.constant 0 : i32
    %c0_i32_1 = arith.constant 0 : i32
    return %c0_i32, %c0_i32_0 : i32, i32
  }
  func.func @transform_5(%arg0: i32) -> (i32, i32, i32) {
    %c0_i32 = arith.constant 0 : i32
    %c0_i32_0 = arith.constant 0 : i32
    %c0_i32_1 = arith.constant 0 : i32
    return %arg0, %c0_i32, %c0_i32_0 : i32, i32, i32
  }
}

</mosaic_0001>

<llo_original>
// kernel: multi_headed_attention.1
$region0: #{multi_headed_attention.1}
  #allocation0 [shape = 'u32[]', space=smem, size = 0x4, offset = 0x4, fixed_abs, tag = 'smem constant byte address 0x4 - core index']
  #allocation1 [shape = 'u32[144,128]{1,0:T(1,128)}', space=vmem, size = 0x12000, scoped, tag = 'internal scratch']
  %s0 = inlined_call_operand.vmem [shape: f32[2,65,1], index: 0, kind: input, shape index: {}]
  %s1 = inlined_call_operand.vmem [shape: f32[1,128], index: 1, kind: input, shape index: {}]
  %s2 = inlined_call_operand.vmem [shape: f32[65,128], index: 2, kind: input, shape index: {}]
  %s3 = inlined_call_operand.vmem [shape: f32[128,384], index: 3, kind: input, shape index: {}]
  %s4 = inlined_call_operand.vmem [shape: f32[128,32], index: 4, kind: input, shape index: {}]
  %s5 = inlined_call_operand.vmem [shape: f32[2,65,128], index: 5, kind: output, shape index: {}]
  %s6 = sld [smem:[#allocation0]]
  $region53: #{multi_headed_attention.1} parent=0
    _
  %s8 = ssub.s32 1, %s6
  %s9 = scalar_select 0, %s8, %s6
  loop: start=0, step=1, limit=4
  $region2: #{multi_headed_attention.1} parent=0 // loop_pre_header
    _
  $region3: #{multi_headed_attention.1} parent=0 // loop_header
    %s11 = sphi 0, %s15
    %p12 = scmp.ge.s32.totalorder %s11, 4
    %s21 = sphi 0, %s23
    %s24 = sphi 0, %s21
    %s25 = sphi 0, %s24
    %s41 = sphi 0, %s25
    %s45 = sphi 0, %s45
    %s47 = sphi 0, %s45
    %s48 = sphi 0, %s47
    %s62 = sphi 0, %s48
    %s66 = sphi 0, %s66
    %s68 = sphi 0, %s66
    %s69 = sphi 0, %s68
    %s83 = sphi 0, %s69
    %s87 = sphi 0, %s87
    %s89 = sphi 0, %s87
    %s90 = sphi 0, %s89
    %s104 = sphi 0, %s90
    %s108 = sphi 0, %s108
    %s110 = sphi 0, %s108
    %s111 = sphi 0, %s110
    %s125 = sphi 0, %s111
    %s131 = sphi 0, %s133
    %s134 = sphi 0, %s131
    %s135 = sphi 0, %s134
    %s151 = sphi 0, %s135
  $region4: #{multi_headed_attention.1} parent=0 // loop_header_branch
    %14 = sbr.rel (%p12) target = $region8
  $region5: #{multi_headed_attention.1} parent=0 // loop_body
    %s16 = ssub.s32 %s11, 1
    %s17 = ssub.s32 %s11, 2
    %s18 = sadd.s32 %s11, 1
    %s19 = ssub.s32 %s11, %s18
    %p20 = scmp.eq.s32.totalorder %s19, 0
    %s22 = sadd.s32 %s21, 1
    %s23 = scalar_select %p20, %s21, %s22
    %p26 = pneg %p20
    %p27 = scmp.eq.s32.totalorder %s11, 1
    %p28 = por %p26, %p27
    %p29 = scmp.ne.s32.totalorder %s21, %s24
    %p30 = scmp.eq.s32.totalorder %s11, 0
    %p31 = por %p29, %p30
    %p32 = scmp.ne.s32.totalorder %s21, %s24
    %p33 = scmp.eq.s32.totalorder %s16, 1
    %p34 = por %p32, %p33
    %p35 = scmp.ne.s32.totalorder %s24, %s25
    %p36 = scmp.eq.s32.totalorder %s16, 0
    %p37 = por %p35, %p36
    %p38 = scmp.ne.s32.totalorder %s24, %s25
    %p39 = scmp.eq.s32.totalorder %s17, 1
    %p40 = por %p38, %p39
    %p42 = scmp.ne.s32.totalorder %s25, %s41
    %p43 = scmp.eq.s32.totalorder %s17, 0
    %p44 = por %p42, %p43
    %s46 = sadd.s32 %s45, 1
    %p49 = scmp.eq.s32.totalorder %s11, 1
    %p50 = scmp.ne.s32.totalorder %s45, %s47
    %p51 = scmp.eq.s32.totalorder %s11, 0
    %p52 = por %p50, %p51
    %p53 = scmp.ne.s32.totalorder %s45, %s47
    %p54 = scmp.eq.s32.totalorder %s16, 1
    %p55 = por %p53, %p54
    %p56 = scmp.ne.s32.totalorder %s47, %s48
    %p57 = scmp.eq.s32.totalorder %s16, 0
    %p58 = por %p56, %p57
    %p59 = scmp.ne.s32.totalorder %s47, %s48
    %p60 = scmp.eq.s32.totalorder %s17, 1
    %p61 = por %p59, %p60
    %p63 = scmp.ne.s32.totalorder %s48, %s62
    %p64 = scmp.eq.s32.totalorder %s17, 0
    %p65 = por %p63, %p64
    %s67 = sadd.s32 %s66, 1
    %p70 = scmp.eq.s32.totalorder %s11, 1
    %p71 = scmp.ne.s32.totalorder %s66, %s68
    %p72 = scmp.eq.s32.totalorder %s11, 0
    %p73 = por %p71, %p72
    %p74 = scmp.ne.s32.totalorder %s66, %s68
    %p75 = scmp.eq.s32.totalorder %s16, 1
    %p76 = por %p74, %p75
    %p77 = scmp.ne.s32.totalorder %s68, %s69
    %p78 = scmp.eq.s32.totalorder %s16, 0
    %p79 = por %p77, %p78
    %p80 = scmp.ne.s32.totalorder %s68, %s69
    %p81 = scmp.eq.s32.totalorder %s17, 1
    %p82 = por %p80, %p81
    %p84 = scmp.ne.s32.totalorder %s69, %s83
    %p85 = scmp.eq.s32.totalorder %s17, 0
    %p86 = por %p84, %p85
    %s88 = sadd.s32 %s87, 1
    %p91 = scmp.eq.s32.totalorder %s11, 1
    %p92 = scmp.ne.s32.totalorder %s87, %s89
    %p93 = scmp.eq.s32.totalorder %s11, 0
    %p94 = por %p92, %p93
    %p95 = scmp.ne.s32.totalorder %s87, %s89
    %p96 = scmp.eq.s32.totalorder %s16, 1
    %p97 = por %p95, %p96
    %p98 = scmp.ne.s32.totalorder %s89, %s90
    %p99 = scmp.eq.s32.totalorder %s16, 0
    %p100 = por %p98, %p99
    %p101 = scmp.ne.s32.totalorder %s89, %s90
    %p102 = scmp.eq.s32.totalorder %s17, 1
    %p103 = por %p101, %p102
    %p105 = scmp.ne.s32.totalorder %s90, %s104
    %p106 = scmp.eq.s32.totalorder %s17, 0
    %p107 = por %p105, %p106
    %s109 = sadd.s32 %s108, 1
    %p112 = scmp.eq.s32.totalorder %s11, 1
    %p113 = scmp.ne.s32.totalorder %s108, %s110
    %p114 = scmp.eq.s32.totalorder %s11, 0
    %p115 = por %p113, %p114
    %p116 = scmp.ne.s32.totalorder %s108, %s110
    %p117 = scmp.eq.s32.totalorder %s16, 1
    %p118 = por %p116, %p117
    %p119 = scmp.ne.s32.totalorder %s110, %s111
    %p120 = scmp.eq.s32.totalorder %s16, 0
    %p121 = por %p119, %p120
    %p122 = scmp.ne.s32.totalorder %s110, %s111
    %p123 = scmp.eq.s32.totalorder %s17, 1
    %p124 = por %p122, %p123
    %p126 = scmp.ne.s32.totalorder %s111, %s125
    %p127 = scmp.eq.s32.totalorder %s17, 0
    %p128 = por %p126, %p127
    %s129 = ssub.s32 %s11, %s18
    %p130 = scmp.eq.s32.totalorder %s129, 0
    %s132 = sadd.s32 %s131, 1
    %s133 = scalar_select %p130, %s131, %s132
    %p136 = pneg %p130
    %p137 = scmp.eq.s32.totalorder %s11, 1
    %p138 = por %p136, %p137
    %p139 = scmp.ne.s32.totalorder %s131, %s134
    %p140 = scmp.eq.s32.totalorder %s11, 0
    %p141 = por %p139, %p140
    %p142 = scmp.ne.s32.totalorder %s131, %s134
    %p143 = scmp.eq.s32.totalorder %s16, 1
    %p144 = por %p142, %p143
    %p145 = scmp.ne.s32.totalorder %s134, %s135
    %p146 = scmp.eq.s32.totalorder %s16, 0
    %p147 = por %p145, %p146
    %p148 = scmp.ne.s32.totalorder %s134, %s135
    %p149 = scmp.eq.s32.totalorder %s17, 1
    %p150 = por %p148, %p149
    %p152 = scmp.ne.s32.totalorder %s135, %s151
    %p153 = scmp.eq.s32.totalorder %s17, 0
    %p154 = por %p152, %p153
    %p155 = scmp.le.s32.totalorder 1, %s11
    %p156 = scmp.lt.s32.totalorder %s11, 3
    %p157 = pnand %p155, %p156
    %p158 = pneg %p157
    // Predicated region
    $region9: #{multi_headed_attention.1} parent=5 // pred_check
      _
    $region10: #{multi_headed_attention.1} parent=5 // pred_check_branch
      %160 = sbr.rel (%p157) target = $region12
    $region11: #{multi_headed_attention.1} parent=5 // pred_region
      %s161 = ssub.s32 %s11, 1
      // Predicated region
      $region13: #{multi_headed_attention.1} parent=11 // pred_check
        %p162 = pneg %p58
      $region14: #{multi_headed_attention.1} parent=11 // pred_check_branch
        %164 = sbr.rel (%p162) target = $region16
      $region15: #{multi_headed_attention.1} parent=11 // pred_region
        _
      $region16: #{multi_headed_attention.1} parent=11 // pred_fallthru
        _
      // Predicated region
      $region17: #{multi_headed_attention.1} parent=11 // pred_check
        %p165 = pneg %p79
      $region18: #{multi_headed_attention.1} parent=11 // pred_check_branch
        %167 = sbr.rel (%p165) target = $region20
      $region19: #{multi_headed_attention.1} parent=11 // pred_region
        _
      $region20: #{multi_headed_attention.1} parent=11 // pred_fallthru
        _
      // Predicated region
      $region21: #{multi_headed_attention.1} parent=11 // pred_check
        %p168 = pneg %p100
      $region22: #{multi_headed_attention.1} parent=11 // pred_check_branch
        %170 = sbr.rel (%p168) target = $region24
      $region23: #{multi_headed_attention.1} parent=11 // pred_region
        _
      $region24: #{multi_headed_attention.1} parent=11 // pred_fallthru
        _
      // Predicated region
      $region25: #{multi_headed_attention.1} parent=11 // pred_check
        %p171 = pneg %p121
      $region26: #{multi_headed_attention.1} parent=11 // pred_check_branch
        %173 = sbr.rel (%p171) target = $region28
      $region27: #{multi_headed_attention.1} parent=11 // pred_region
        _
      $region28: #{multi_headed_attention.1} parent=11 // pred_fallthru
        _
    $region12: #{multi_headed_attention.1} parent=5 // pred_fallthru
      _
    %p174 = scmp.lt.s32.totalorder %s11, 2
    // Predicated region
    $region29: #{multi_headed_attention.1} parent=5 // pred_check
      %p175 = pneg %p174
    $region30: #{multi_headed_attention.1} parent=5 // pred_check_branch
      %177 = sbr.rel (%p175) target = $region32
    $region31: #{multi_headed_attention.1} parent=5 // pred_region
      // Predicated region
      $region33: #{multi_headed_attention.1} parent=31 // pred_check
        %p178 = pneg %p31
      $region34: #{multi_headed_attention.1} parent=31 // pred_check_branch
        %180 = sbr.rel (%p178) target = $region36
      $region35: #{multi_headed_attention.1} parent=31 // pred_region
        %p181 = scmp.lt.s32.totalorder %s11, 1
        %s182 = scalar_select %p181, %s11, 1
        %s183 = smul.addr %s182, 9
        %s184 = smul.addr %s183, 8
        %s185 = scalar_lea.vmem %s0, %s184
      $region36: #{multi_headed_attention.1} parent=31 // pred_fallthru
        _
    $region32: #{multi_headed_attention.1} parent=5 // pred_fallthru
      _
    %p186 = scmp.le.s32.totalorder 1, %s11
    %p187 = scmp.lt.s32.totalorder %s11, 3
    %p188 = pnand %p186, %p187
    %p189 = pneg %p188
    // Predicated region
    $region37: #{multi_headed_attention.1} parent=5 // pred_check
      _
    $region38: #{multi_headed_attention.1} parent=5 // pred_check_branch
      %191 = sbr.rel (%p188) target = $region40
    $region39: #{multi_headed_attention.1} parent=5 // pred_region
      %s192 = ssub.s32 %s11, 1
      %p193 = scmp.lt.s32.totalorder %s16, 1
      %s194 = scalar_select %p193, %s16, 1
      %s195 = smul.addr %s194, 9
      %s196 = smul.addr %s195, 8
      %s197 = scalar_lea.vmem %s0, %s196
      %p198 = pneg %p37
      %p199 = pneg %p34
      %p200 = pneg %p58
      %p201 = pneg %p55
      %p202 = pneg %p79
      %p203 = pneg %p76
      %p204 = pneg %p100
      %p205 = pneg %p97
      %p206 = pneg %p121
      %p207 = pneg %p118
      %p208 = pneg %p147
      %p209 = pneg %p144
      %p210 = scmp.lt.s32.totalorder %s16, 1
      %s211 = scalar_select %p210, %s16, 1
      %s212 = smul.addr %s211, 9
      %s213 = smul.addr %s212, 8
      %s214 = scalar_lea.vmem %s5, %s213
      %p215 = scmp.lt.s32.totalorder %s16, 1
      %s216 = scalar_select %p215, %s16, 1
      %s217 = smul.addr %s216, 9
      %s218 = smul.addr %s217, 8
      %s219 = scalar_lea.vmem %s0, %s218
      %p220 = scmp.lt.s32.totalorder %s16, 1
      %s221 = scalar_select %p220, %s16, 1
      %s222 = smul.addr %s221, 9
      %s223 = smul.addr %s222, 8
      %s224 = scalar_lea.vmem %s5, %s223
      %v225 = vld [vmem:[%s219] sm:$0xff]
      %v226 = vld [vmem:[%s219 + $0x8] sm:$0xff]
      %v227 = vld [vmem:[%s219 + $0x10] sm:$0xff]
      %v228 = vld [vmem:[%s219 + $0x18] sm:$0xff]
      %v229 = vld [vmem:[%s219 + $0x20] sm:$0xff]
      %v230 = vld [vmem:[%s219 + $0x28] sm:$0xff]
      %v231 = vld [vmem:[%s219 + $0x30] sm:$0xff]
      %v232 = vld [vmem:[%s219 + $0x38] sm:$0xff]
      %v233 = vld [vmem:[%s219 + $0x40] sm:$0x1]
      %v234 = vld [vmem:[%s1] sm:$0x1]
      %236 = vset.pattern.permute.xlu0 0
      %237 = vperm.xlu0 %236, %v225
      %v238 = vpop.permute.xlu0 %237
      %241 = vset.pattern.permute.xlu0 0
      %242 = vperm.xlu0 %241, %v226
      %v243 = vpop.permute.xlu0 %242
      %246 = vset.pattern.permute.xlu0 0
      %247 = vperm.xlu0 %246, %v227
      %v248 = vpop.permute.xlu0 %247
      %251 = vset.pattern.permute.xlu0 0
      %252 = vperm.xlu0 %251, %v228
      %v253 = vpop.permute.xlu0 %252
      %256 = vset.pattern.permute.xlu0 0
      %257 = vperm.xlu0 %256, %v229
      %v258 = vpop.permute.xlu0 %257
      %261 = vset.pattern.permute.xlu0 0
      %262 = vperm.xlu0 %261, %v230
      %v263 = vpop.permute.xlu0 %262
      %266 = vset.pattern.permute.xlu0 0
      %267 = vperm.xlu0 %266, %v231
      %v268 = vpop.permute.xlu0 %267
      %271 = vset.pattern.permute.xlu0 0
      %272 = vperm.xlu0 %271, %v232
      %v273 = vpop.permute.xlu0 %272
      %276 = vset.pattern.permute.xlu0 0
      %277 = vperm.xlu0 %276, %v233
      %v278 = vpop.permute.xlu0 %277
      %v281 = vlaneseq
      %v282 = vshrl.u32 %v281, 7
      %v283 = vsub.s32 0, %v282
      %v284 = vrot.slane %v234, %v283
      %v286 = vmul.f32 %v238, %v284
      %v287 = vmul.f32 %v243, %v284
      %v288 = vmul.f32 %v248, %v284
      %v289 = vmul.f32 %v253, %v284
      %v290 = vmul.f32 %v258, %v284
      %v291 = vmul.f32 %v263, %v284
      %v292 = vmul.f32 %v268, %v284
      %v293 = vmul.f32 %v273, %v284
      %v294 = vmul.f32 %v278, %v284
      %v295 = vld [vmem:[%s2] sm:$0xff]
      %v296 = vld [vmem:[%s2 + $0x8] sm:$0xff]
      %v297 = vld [vmem:[%s2 + $0x10] sm:$0xff]
      %v298 = vld [vmem:[%s2 + $0x18] sm:$0xff]
      %v299 = vld [vmem:[%s2 + $0x20] sm:$0xff]
      %v300 = vld [vmem:[%s2 + $0x28] sm:$0xff]
      %v301 = vld [vmem:[%s2 + $0x30] sm:$0xff]
      %v302 = vld [vmem:[%s2 + $0x38] sm:$0xff]
      %v303 = vld [vmem:[%s2 + $0x40] sm:$0x1]
      %v304 = vadd.f32 %v286, %v295
      %v305 = vadd.f32 %v287, %v296
      %v306 = vadd.f32 %v288, %v297
      %v307 = vadd.f32 %v289, %v298
      %v308 = vadd.f32 %v290, %v299
      %v309 = vadd.f32 %v291, %v300
      %v310 = vadd.f32 %v292, %v301
      %v311 = vadd.f32 %v293, %v302
      %v312 = vadd.f32 %v294, %v303
      %v313 = vld [vmem:[%s3] sm:$0xff]
      %v314 = vld [vmem:[%s3 + $0x8] sm:$0xff]
      %v315 = vld [vmem:[%s3 + $0x10] sm:$0xff]
      %v316 = vld [vmem:[%s3 + $0x18] sm:$0xff]
      %v317 = vld [vmem:[%s3 + $0x20] sm:$0xff]
      %v318 = vld [vmem:[%s3 + $0x28] sm:$0xff]
      %v319 = vld [vmem:[%s3 + $0x30] sm:$0xff]
      %v320 = vld [vmem:[%s3 + $0x38] sm:$0xff]
      %v321 = vld [vmem:[%s3 + $0x40] sm:$0xff]
      %v322 = vld [vmem:[%s3 + $0x48] sm:$0xff]
      %v323 = vld [vmem:[%s3 + $0x50] sm:$0xff]
      %v324 = vld [vmem:[%s3 + $0x58] sm:$0xff]
      %v325 = vld [vmem:[%s3 + $0x60] sm:$0xff]
      %v326 = vld [vmem:[%s3 + $0x68] sm:$0xff]
      %v327 = vld [vmem:[%s3 + $0x70] sm:$0xff]
      %v328 = vld [vmem:[%s3 + $0x78] sm:$0xff]
      %v329 = vld [vmem:[%s3 + $0x80] sm:$0xff]
      %v330 = vld [vmem:[%s3 + $0x88] sm:$0xff]
      %v331 = vld [vmem:[%s3 + $0x90] sm:$0xff]
      %v332 = vld [vmem:[%s3 + $0x98] sm:$0xff]
      %v333 = vld [vmem:[%s3 + $0xa0] sm:$0xff]
      %v334 = vld [vmem:[%s3 + $0xa8] sm:$0xff]
      %v335 = vld [vmem:[%s3 + $0xb0] sm:$0xff]
      %v336 = vld [vmem:[%s3 + $0xb8] sm:$0xff]
      %v337 = vld [vmem:[%s3 + $0xc0] sm:$0xff]
      %v338 = vld [vmem:[%s3 + $0xc8] sm:$0xff]
      %v339 = vld [vmem:[%s3 + $0xd0] sm:$0xff]
      %v340 = vld [vmem:[%s3 + $0xd8] sm:$0xff]
      %v341 = vld [vmem:[%s3 + $0xe0] sm:$0xff]
      %v342 = vld [vmem:[%s3 + $0xe8] sm:$0xff]
      %v343 = vld [vmem:[%s3 + $0xf0] sm:$0xff]
      %v344 = vld [vmem:[%s3 + $0xf8] sm:$0xff]
      %v345 = vld [vmem:[%s3 + $0x100] sm:$0xff]
      %v346 = vld [vmem:[%s3 + $0x108] sm:$0xff]
      %v347 = vld [vmem:[%s3 + $0x110] sm:$0xff]
      %v348 = vld [vmem:[%s3 + $0x118] sm:$0xff]
      %v349 = vld [vmem:[%s3 + $0x120] sm:$0xff]
      %v350 = vld [vmem:[%s3 + $0x128] sm:$0xff]
      %v351 = vld [vmem:[%s3 + $0x130] sm:$0xff]
      %v352 = vld [vmem:[%s3 + $0x138] sm:$0xff]
      %v353 = vld [vmem:[%s3 + $0x140] sm:$0xff]
      %v354 = vld [vmem:[%s3 + $0x148] sm:$0xff]
      %v355 = vld [vmem:[%s3 + $0x150] sm:$0xff]
      %v356 = vld [vmem:[%s3 + $0x158] sm:$0xff]
      %v357 = vld [vmem:[%s3 + $0x160] sm:$0xff]
      %v358 = vld [vmem:[%s3 + $0x168] sm:$0xff]
      %v359 = vld [vmem:[%s3 + $0x170] sm:$0xff]
      %v360 = vld [vmem:[%s3 + $0x178] sm:$0xff]
      %361 = vmatprep.subr.mxu0 %v314
      %362 = vmatpush1.msra.mxu0 %v313
      %363 = vmatprep.subr.mxu0 %v317
      %364 = vmatpush1.msra.mxu0 %v316
      %365 = vmatprep.subr.mxu0 %v320
      %366 = vmatpush1.msra.mxu0 %v319
      %367 = vmatprep.subr.mxu0 %v323
      %368 = vmatpush1.msra.mxu0 %v322
      %369 = vmatprep.subr.mxu0 %v326
      %370 = vmatpush1.msra.mxu0 %v325
      %371 = vmatprep.subr.mxu0 %v329
      %372 = vmatpush1.msra.mxu0 %v328
      %373 = vmatprep.subr.mxu0 %v332
      %374 = vmatpush1.msra.mxu0 %v331
      %375 = vmatprep.subr.mxu0 %v335
      %376 = vmatpush1.msra.mxu0 %v334
      %377 = vmatprep.subr.mxu0 %v338
      %378 = vmatpush1.msra.mxu0 %v337
      %379 = vmatprep.subr.mxu0 %v341
      %380 = vmatpush1.msra.mxu0 %v340
      %381 = vmatprep.subr.mxu0 %v344
      %382 = vmatpush1.msra.mxu0 %v343
      %383 = vmatprep.subr.mxu0 %v347
      %384 = vmatpush1.msra.mxu0 %v346
      %385 = vmatprep.subr.mxu0 %v350
      %386 = vmatpush1.msra.mxu0 %v349
      %387 = vmatprep.subr.mxu0 %v353
      %388 = vmatpush1.msra.mxu0 %v352
      %389 = vmatprep.subr.mxu0 %v356
      %390 = vmatpush1.msra.mxu0 %v355
      %391 = vmatprep.subr.mxu0 %v359
      %392 = vmatpush1.msra.mxu0 %v358
      %393 = vmatprep.subr.mxu0 0.0
      %394 = vmatpush1.msra.mxu0 0.0
      %395 = vmatprep.subr.mxu0 0.0
      %396 = vmatpush1.msra.mxu0 0.0
      %397 = vmatprep.subr.mxu0 0.0
      %398 = vmatpush1.msra.mxu0 0.0
      %399 = vmatprep.subr.mxu0 0.0
      %400 = vmatpush1.msra.mxu0 0.0
      %401 = vmatprep.subr.mxu0 0.0
      %402 = vmatpush1.msra.mxu0 0.0
      %403 = vmatprep.subr.mxu0 0.0
      %404 = vmatpush1.msra.mxu0 0.0
      %405 = vmatprep.subr.mxu0 0.0
      %406 = vmatpush1.msra.mxu0 0.0
      %407 = vmatprep.subr.mxu0 0.0
      %408 = vmatpush1.msra.mxu0 0.0
      %409 = vmatprep.subr.mxu0 0.0
      %410 = vmatpush1.msra.mxu0 0.0
      %411 = vmatprep.subr.mxu0 0.0
      %412 = vmatpush1.msra.mxu0 0.0
      %413 = vmatprep.subr.mxu0 0.0
      %414 = vmatpush1.msra.mxu0 0.0
      %415 = vmatprep.subr.mxu0 0.0
      %416 = vmatpush1.msra.mxu0 0.0
      %417 = vmatprep.subr.mxu0 0.0
      %418 = vmatpush1.msra.mxu0 0.0
      %419 = vmatprep.subr.mxu0 0.0
      %420 = vmatpush1.msra.mxu0 0.0
      %421 = vmatprep.subr.mxu0 0.0
      %422 = vmatpush1.msra.mxu0 0.0
      %423 = vmatprep.subr.mxu0 0.0
      %424 = vmatpush1.msra.mxu0 0.0
      %425 = vmatprep.mubr.f32.mxu0 0.0
      %426 = vmatmul.mubr.f32.gmra.mrb[0].mxu0 %v304
      %v427 = vpop.f32.mrb[0].mxu0
      %v428 = vadd.f32 0.0, %v427
      %v429 = vpop.f32.mrb[0].mxu0
      %v430 = vadd.f32 0.0, %v429
      %431 = vmatprep.mubr.f32.mxu0 0.0
      %432 = vmatmul.mubr.f32.gmra.mrb[0].mxu0 %v305
      %v433 = vpop.f32.mrb[0].mxu0
      %v434 = vadd.f32 0.0, %v433
      %v435 = vpop.f32.mrb[0].mxu0
      %v436 = vadd.f32 0.0, %v435
      %437 = vmatprep.mubr.f32.mxu0 0.0
      %438 = vmatmul.mubr.f32.gmra.mrb[0].mxu0 %v306
      %v439 = vpop.f32.mrb[0].mxu0
      %v440 = vadd.f32 0.0, %v439
      %v441 = vpop.f32.mrb[0].mxu0
      %v442 = vadd.f32 0.0, %v441
      %443 = vmatprep.mubr.f32.mxu0 0.0
      %444 = vmatmul.mubr.f32.gmra.mrb[0].mxu0 %v307
      %v445 = vpop.f32.mrb[0].mxu0
      %v446 = vadd.f32 0.0, %v445
      %v447 = vpop.f32.mrb[0].mxu0
      %v448 = vadd.f32 0.0, %v447
      %449 = vmatprep.mubr.f32.mxu0 0.0
      %450 = vmatmul.mubr.f32.gmra.mrb[0].mxu0 %v308
      %v451 = vpop.f32.mrb[0].mxu0
      %v452 = vadd.f32 0.0, %v451
      %v453 = vpop.f32.mrb[0].mxu0
      %v454 = vadd.f32 0.0, %v453
      %455 = vmatprep.mubr.f32.mxu0 0.0
      %456 = vmatmul.mubr.f32.gmra.mrb[0].mxu0 %v309
      %v457 = vpop.f32.mrb[0].mxu0
      %v458 = vadd.f32 0.0, %v457
      %v459 = vpop.f32.mrb[0].mxu0
      %v460 = vadd.f32 0.0, %v459
      %461 = vmatprep.mubr.f32.mxu0 0.0
      %462 = vmatmul.mubr.f32.gmra.mrb[0].mxu0 %v310
      %v463 = vpop.f32.mrb[0].mxu0
      %v464 = vadd.f32 0.0, %v463
      %v465 = vpop.f32.mrb[0].mxu0
      %v466 = vadd.f32 0.0, %v465
      %467 = vmatprep.mubr.f32.mxu0 0.0
      %468 = vmatmul.mubr.f32.gmra.mrb[0].mxu0 %v311
      %v469 = vpop.f32.mrb[0].mxu0
      %v470 = vadd.f32 0.0, %v469
      %v471 = vpop.f32.mrb[0].mxu0
      %v472 = vadd.f32 0.0, %v471
      %473 = vmatprep.mubr.f32.mxu0 0.0
      %474 = vmatmul.mubr.f32.gmra.mrb[0].mxu0 %v312
      %v475 = vpop.f32.mrb[0].mxu0
      %v476 = vadd.f32 0.0, %v475
      %v477 = vpop.f32.mrb[0].mxu0
      %v478 = vadd.f32 0.0, %v477
      %479 = vdwg.mxu0
      %480 = vmatprep.subr.mxu0 0.0
      %481 = vmatpush1.msra.mxu0 %v315
      %482 = vmatprep.subr.mxu0 0.0
      %483 = vmatpush1.msra.mxu0 %v318
      %484 = vmatprep.subr.mxu0 0.0
      %485 = vmatpush1.msra.mxu0 %v321
      %486 = vmatprep.subr.mxu0 0.0
      %487 = vmatpush1.msra.mxu0 %v324
      %488 = vmatprep.subr.mxu0 0.0
      %489 = vmatpush1.msra.mxu0 %v327
      %490 = vmatprep.subr.mxu0 0.0
      %491 = vmatpush1.msra.mxu0 %v330
      %492 = vmatprep.subr.mxu0 0.0
      %493 = vmatpush1.msra.mxu0 %v333
      %494 = vmatprep.subr.mxu0 0.0
      %495 = vmatpush1.msra.mxu0 %v336
      %496 = vmatprep.subr.mxu0 0.0
      %497 = vmatpush1.msra.mxu0 %v339
      %498 = vmatprep.subr.mxu0 0.0
      %499 = vmatpush1.msra.mxu0 %v342
      %500 = vmatprep.subr.mxu0 0.0
      %501 = vmatpush1.msra.mxu0 %v345
      %502 = vmatprep.subr.mxu0 0.0
      %503 = vmatpush1.msra.mxu0 %v348
      %504 = vmatprep.subr.mxu0 0.0
      %505 = vmatpush1.msra.mxu0 %v351
      %506 = vmatprep.subr.mxu0 0.0
      %507 = vmatpush1.msra.mxu0 %v354
      %508 = vmatprep.subr.mxu0 0.0
      %509 = vmatpush1.msra.mxu0 %v357
      %510 = vmatprep.subr.mxu0 0.0
      %511 = vmatpush1.msra.mxu0 %v360
      %512 = vmatprep.subr.mxu0 0.0
      %513 = vmatpush1.msra.mxu0 0.0
      %514 = vmatprep.subr.mxu0 0.0
      %515 = vmatpush1.msra.mxu0 0.0
      %516 = vmatprep.subr.mxu0 0.0
      %517 = vmatpush1.msra.mxu0 0.0
      %518 = vmatprep.subr.mxu0 0.0
      %519 = vmatpush1.msra.mxu0 0.0
      %520 = vmatprep.subr.mxu0 0.0
      %521 = vmatpush1.msra.mxu0 0.0
      %522 = vmatprep.subr.mxu0 0.0
      %523 = vmatpush1.msra.mxu0 0.0
      %524 = vmatprep.subr.mxu0 0.0
      %525 = vmatpush1.msra.mxu0 0.0
      %526 = vmatprep.subr.mxu0 0.0
      %527 = vmatpush1.msra.mxu0 0.0
      %528 = vmatprep.subr.mxu0 0.0
      %529 = vmatpush1.msra.mxu0 0.0
      %530 = vmatprep.subr.mxu0 0.0
      %531 = vmatpush1.msra.mxu0 0.0
      %532 = vmatprep.subr.mxu0 0.0
      %533 = vmatpush1.msra.mxu0 0.0
      %534 = vmatprep.subr.mxu0 0.0
      %535 = vmatpush1.msra.mxu0 0.0
      %536 = vmatprep.subr.mxu0 0.0
      %537 = vmatpush1.msra.mxu0 0.0
      %538 = vmatprep.subr.mxu0 0.0
      %539 = vmatpush1.msra.mxu0 0.0
      %540 = vmatprep.subr.mxu0 0.0
      %541 = vmatpush1.msra.mxu0 0.0
      %542 = vmatprep.subr.mxu0 0.0
      %543 = vmatpush1.msra.mxu0 0.0
      %544 = vmatprep.mubr.f32.mxu0 0.0
      %545 = vmatmul.mubr.f32.gmra.mrb[0].mxu0 %v304
      %v546 = vpop.f32.mrb[0].mxu0
      %v547 = vadd.f32 0.0, %v546
      %v548 = vpop.f32.mrb[0].mxu0
      %549 = vmatprep.mubr.f32.mxu0 0.0
      %550 = vmatmul.mubr.f32.gmra.mrb[0].mxu0 %v305
      %v551 = vpop.f32.mrb[0].mxu0
      %v552 = vadd.f32 0.0, %v551
      %v553 = vpop.f32.mrb[0].mxu0
      %554 = vmatprep.mubr.f32.mxu0 0.0
      %555 = vmatmul.mubr.f32.gmra.mrb[0].mxu0 %v306
      %v556 = vpop.f32.mrb[0].mxu0
      %v557 = vadd.f32 0.0, %v556
      %v558 = vpop.f32.mrb[0].mxu0
      %559 = vmatprep.mubr.f32.mxu0 0.0
      %560 = vmatmul.mubr.f32.gmra.mrb[0].mxu0 %v307
      %v561 = vpop.f32.mrb[0].mxu0
      %v562 = vadd.f32 0.0, %v561
      %v563 = vpop.f32.mrb[0].mxu0
      %564 = vmatprep.mubr.f32.mxu0 0.0
      %565 = vmatmul.mubr.f32.gmra.mrb[0].mxu0 %v308
      %v566 = vpop.f32.mrb[0].mxu0
      %v567 = vadd.f32 0.0, %v566
      %v568 = vpop.f32.mrb[0].mxu0
      %569 = vmatprep.mubr.f32.mxu0 0.0
      %570 = vmatmul.mubr.f32.gmra.mrb[0].mxu0 %v309
      %v571 = vpop.f32.mrb[0].mxu0
      %v572 = vadd.f32 0.0, %v571
      %v573 = vpop.f32.mrb[0].mxu0
      %574 = vmatprep.mubr.f32.mxu0 0.0
      %575 = vmatmul.mubr.f32.gmra.mrb[0].mxu0 %v310
      %v576 = vpop.f32.mrb[0].mxu0
      %v577 = vadd.f32 0.0, %v576
      %v578 = vpop.f32.mrb[0].mxu0
      %579 = vmatprep.mubr.f32.mxu0 0.0
      %580 = vmatmul.mubr.f32.gmra.mrb[0].mxu0 %v311
      %v581 = vpop.f32.mrb[0].mxu0
      %v582 = vadd.f32 0.0, %v581
      %v583 = vpop.f32.mrb[0].mxu0
      %584 = vmatprep.mubr.f32.mxu0 0.0
      %585 = vmatmul.mubr.f32.gmra.mrb[0].mxu0 %v312
      %v586 = vpop.f32.mrb[0].mxu0
      %v587 = vadd.f32 0.0, %v586
      %v588 = vpop.f32.mrb[0].mxu0
      %589 = vdwg.mxu0
      %vm590 = vcmask 261120
      %v592 = vsel %vm590, %v428, 0
      %v595 = vsel %vm590, %v434, 0
      %v598 = vsel %vm590, %v440, 0
      %v601 = vsel %vm590, %v446, 0
      %v604 = vsel %vm590, %v452, 0
      %v607 = vsel %vm590, %v458, 0
      %v610 = vsel %vm590, %v464, 0
      %v613 = vsel %vm590, %v470, 0
      %v616 = vsel %vm590, %v476, 0
      %v619 = vsel %vm590, %v430, 0
      %v622 = vsel %vm590, %v436, 0
      %v625 = vsel %vm590, %v442, 0
      %v628 = vsel %vm590, %v448, 0
      %v631 = vsel %vm590, %v454, 0
      %v634 = vsel %vm590, %v460, 0
      %v637 = vsel %vm590, %v466, 0
      %v640 = vsel %vm590, %v472, 0
      %v643 = vsel %vm590, %v478, 0
      %645 = vmatprep.subr.mxu0 0.0
      %646 = vmatpush1.xpose.msra.mxu0 %v619
      %647 = vmatprep.subr.mxu0 0.0
      %648 = vmatpush1.xpose.msra.mxu0 %v622
      %649 = vmatprep.subr.mxu0 0.0
      %650 = vmatpush1.xpose.msra.mxu0 %v625
      %651 = vmatprep.subr.mxu0 0.0
      %652 = vmatpush1.xpose.msra.mxu0 %v628
      %653 = vmatprep.subr.mxu0 0.0
      %654 = vmatpush1.xpose.msra.mxu0 %v631
      %655 = vmatprep.subr.mxu0 0.0
      %656 = vmatpush1.xpose.msra.mxu0 %v634
      %657 = vmatprep.subr.mxu0 0.0
      %658 = vmatpush1.xpose.msra.mxu0 %v637
      %659 = vmatprep.subr.mxu0 0.0
      %660 = vmatpush1.xpose.msra.mxu0 %v640
      %661 = vmatprep.subr.mxu0 0.0
      %662 = vmatpush1.xpose.msra.mxu0 %v643
      %663 = vmatprep.subr.mxu0 0.0
      %664 = vmatpush1.xpose.msra.mxu0 0.0
      %665 = vmatprep.subr.mxu0 0.0
      %666 = vmatpush1.xpose.msra.mxu0 0.0
      %667 = vmatprep.subr.mxu0 0.0
      %668 = vmatpush1.xpose.msra.mxu0 0.0
      %669 = vmatprep.subr.mxu0 0.0
      %670 = vmatpush1.xpose.msra.mxu0 0.0
      %671 = vmatprep.subr.mxu0 0.0
      %672 = vmatpush1.xpose.msra.mxu0 0.0
      %673 = vmatprep.subr.mxu0 0.0
      %674 = vmatpush1.xpose.msra.mxu0 0.0
      %675 = vmatprep.subr.mxu0 0.0
      %676 = vmatpush1.xpose.msra.mxu0 0.0
      %677 = vmatprep.subr.mxu0 0.0
      %678 = vmatpush1.xpose.msra.mxu0 0.0
      %679 = vmatprep.subr.mxu0 0.0
      %680 = vmatpush1.xpose.msra.mxu0 0.0
      %681 = vmatprep.subr.mxu0 0.0
      %682 = vmatpush1.xpose.msra.mxu0 0.0
      %683 = vmatprep.subr.mxu0 0.0
      %684 = vmatpush1.xpose.msra.mxu0 0.0
      %685 = vmatprep.subr.mxu0 0.0
      %686 = vmatpush1.xpose.msra.mxu0 0.0
      %687 = vmatprep.subr.mxu0 0.0
      %688 = vmatpush1.xpose.msra.mxu0 0.0
      %689 = vmatprep.subr.mxu0 0.0
      %690 = vmatpush1.xpose.msra.mxu0 0.0
      %691 = vmatprep.subr.mxu0 0.0
      %692 = vmatpush1.xpose.msra.mxu0 0.0
      %693 = vmatprep.subr.mxu0 0.0
      %694 = vmatpush1.xpose.msra.mxu0 0.0
      %695 = vmatprep.subr.mxu0 0.0
      %696 = vmatpush1.xpose.msra.mxu0 0.0
      %697 = vmatprep.subr.mxu0 0.0
      %698 = vmatpush1.xpose.msra.mxu0 0.0
      %699 = vmatprep.subr.mxu0 0.0
      %700 = vmatpush1.xpose.msra.mxu0 0.0
      %701 = vmatprep.subr.mxu0 0.0
      %702 = vmatpush1.xpose.msra.mxu0 0.0
      %703 = vmatprep.subr.mxu0 0.0
      %704 = vmatpush1.xpose.msra.mxu0 0.0
      %705 = vmatprep.subr.mxu0 0.0
      %706 = vmatpush1.xpose.msra.mxu0 0.0
      %707 = vmatprep.subr.mxu0 0.0
      %708 = vmatpush1.xpose.msra.mxu0 0.0
      %709 = vmatprep.mubr.f32.mxu0 0.0
      %710 = vmatmul.mubr.f32.gmra.mrb[0].mxu0 %v592
      %v711 = vpop.f32.mrb[0].mxu0
      %v712 = vadd.f32 0.0, %v711
      %v713 = vpop.f32.mrb[0].mxu0
      %714 = vmatprep.mubr.f32.mxu0 0.0
      %715 = vmatmul.mubr.f32.gmra.mrb[0].mxu0 %v595
      %v716 = vpop.f32.mrb[0].mxu0
      %v717 = vadd.f32 0.0, %v716
      %v718 = vpop.f32.mrb[0].mxu0
      %719 = vmatprep.mubr.f32.mxu0 0.0
      %720 = vmatmul.mubr.f32.gmra.mrb[0].mxu0 %v598
      %v721 = vpop.f32.mrb[0].mxu0
      %v722 = vadd.f32 0.0, %v721
      %v723 = vpop.f32.mrb[0].mxu0
      %724 = vmatprep.mubr.f32.mxu0 0.0
      %725 = vmatmul.mubr.f32.gmra.mrb[0].mxu0 %v601
      %v726 = vpop.f32.mrb[0].mxu0
      %v727 = vadd.f32 0.0, %v726
      %v728 = vpop.f32.mrb[0].mxu0
      %729 = vmatprep.mubr.f32.mxu0 0.0
      %730 = vmatmul.mubr.f32.gmra.mrb[0].mxu0 %v604
      %v731 = vpop.f32.mrb[0].mxu0
      %v732 = vadd.f32 0.0, %v731
      %v733 = vpop.f32.mrb[0].mxu0
      %734 = vmatprep.mubr.f32.mxu0 0.0
      %735 = vmatmul.mubr.f32.gmra.mrb[0].mxu0 %v607
      %v736 = vpop.f32.mrb[0].mxu0
      %v737 = vadd.f32 0.0, %v736
      %v738 = vpop.f32.mrb[0].mxu0
      %739 = vmatprep.mubr.f32.mxu0 0.0
      %740 = vmatmul.mubr.f32.gmra.mrb[0].mxu0 %v610
      %v741 = vpop.f32.mrb[0].mxu0
      %v742 = vadd.f32 0.0, %v741
      %v743 = vpop.f32.mrb[0].mxu0
      %744 = vmatprep.mubr.f32.mxu0 0.0
      %745 = vmatmul.mubr.f32.gmra.mrb[0].mxu0 %v613
      %v746 = vpop.f32.mrb[0].mxu0
      %v747 = vadd.f32 0.0, %v746
      %v748 = vpop.f32.mrb[0].mxu0
      %749 = vmatprep.mubr.f32.mxu0 0.0
      %750 = vmatmul.mubr.f32.gmra.mrb[0].mxu0 %v616
      %v751 = vpop.f32.mrb[0].mxu0
      %v752 = vadd.f32 0.0, %v751
      %v753 = vpop.f32.mrb[0].mxu0
      %754 = vdwg.mxu0
      %vm755 = vcmask 531456
      %v756 = vsel %vm755, %v712, -inf
      %757 = vmax.xlane.f32.xlu0 %v756
      %v758 = vpop.xlane.xlu0 %757
      %v759 = vsel %vm755, %v717, -inf
      %760 = vmax.xlane.f32.xlu0 %v759
      %v761 = vpop.xlane.xlu0 %760
      %v762 = vsel %vm755, %v722, -inf
      %763 = vmax.xlane.f32.xlu0 %v762
      %v764 = vpop.xlane.xlu0 %763
      %v765 = vsel %vm755, %v727, -inf
      %766 = vmax.xlane.f32.xlu0 %v765
      %v767 = vpop.xlane.xlu0 %766
      %v768 = vsel %vm755, %v732, -inf
      %769 = vmax.xlane.f32.xlu0 %v768
      %v770 = vpop.xlane.xlu0 %769
      %v771 = vsel %vm755, %v737, -inf
      %772 = vmax.xlane.f32.xlu0 %v771
      %v773 = vpop.xlane.xlu0 %772
      %v774 = vsel %vm755, %v742, -inf
      %775 = vmax.xlane.f32.xlu0 %v774
      %v776 = vpop.xlane.xlu0 %775
      %v777 = vsel %vm755, %v747, -inf
      %778 = vmax.xlane.f32.xlu0 %v777
      %v779 = vpop.xlane.xlu0 %778
      %vm780 = vcmask 524288
      %v781 = vsel %vm780, %v752, -inf
      %782 = vmax.xlane.f32.xlu0 %v781
      %v783 = vpop.xlane.xlu0 %782
      %v784 = vsub.f32 %v712, %v758
      %v785 = vsub.f32 %v717, %v761
      %v786 = vsub.f32 %v722, %v764
      %v787 = vsub.f32 %v727, %v767
      %v788 = vsub.f32 %v732, %v770
      %v789 = vsub.f32 %v737, %v773
      %v790 = vsub.f32 %v742, %v776
      %v791 = vsub.f32 %v747, %v779
      %v792 = vsub.f32 %v752, %v783
      %v793 = vmul.f32 %v784, 1.442695
      %v794 = vpow.pop %v793
      %v795 = vmul.f32 %v785, 1.442695
      %v796 = vpow.pop %v795
      %v797 = vmul.f32 %v786, 1.442695
      %v798 = vpow.pop %v797
      %v799 = vmul.f32 %v787, 1.442695
      %v800 = vpow.pop %v799
      %v801 = vmul.f32 %v788, 1.442695
      %v802 = vpow.pop %v801
      %v803 = vmul.f32 %v789, 1.442695
      %v804 = vpow.pop %v803
      %v805 = vmul.f32 %v790, 1.442695
      %v806 = vpow.pop %v805
      %v807 = vmul.f32 %v791, 1.442695
      %v808 = vpow.pop %v807
      %v809 = vmul.f32 %v792, 1.442695
      %v810 = vpow.pop %v809
      %v811 = vsel %vm755, %v794, 0.0
      %812 = vadd.xlane.f32.xlu0 %v811
      %v813 = vpop.xlane.xlu0 %812
      %v814 = vsel %vm755, %v796, 0.0
      %815 = vadd.xlane.f32.xlu0 %v814
      %v816 = vpop.xlane.xlu0 %815
      %v817 = vsel %vm755, %v798, 0.0
      %818 = vadd.xlane.f32.xlu0 %v817
      %v819 = vpop.xlane.xlu0 %818
      %v820 = vsel %vm755, %v800, 0.0
      %821 = vadd.xlane.f32.xlu0 %v820
      %v822 = vpop.xlane.xlu0 %821
      %v823 = vsel %vm755, %v802, 0.0
      %824 = vadd.xlane.f32.xlu0 %v823
      %v825 = vpop.xlane.xlu0 %824
      %v826 = vsel %vm755, %v804, 0.0
      %827 = vadd.xlane.f32.xlu0 %v826
      %v828 = vpop.xlane.xlu0 %827
      %v829 = vsel %vm755, %v806, 0.0
      %830 = vadd.xlane.f32.xlu0 %v829
      %v831 = vpop.xlane.xlu0 %830
      %v832 = vsel %vm755, %v808, 0.0
      %833 = vadd.xlane.f32.xlu0 %v832
      %v834 = vpop.xlane.xlu0 %833
      %v835 = vsel %vm780, %v810, 0.0
      %836 = vadd.xlane.f32.xlu0 %v835
      %v837 = vpop.xlane.xlu0 %836
      %v838 = vmul.f32 %v428, %v430
      %v839 = vmul.f32 %v434, %v436
      %v840 = vmul.f32 %v440, %v442
      %v841 = vmul.f32 %v446, %v448
      %v842 = vmul.f32 %v452, %v454
      %v843 = vmul.f32 %v458, %v460
      %v844 = vmul.f32 %v464, %v466
      %v845 = vmul.f32 %v470, %v472
      %v846 = vmul.f32 %v476, %v478
      %v847 = vsel %vm590, %v838, 0.0
      %848 = vadd.xlane.f32.xlu0 %v847
      %v849 = vpop.xlane.xlu0 %848
      %v850 = vsel %vm590, %v839, 0.0
      %851 = vadd.xlane.f32.xlu0 %v850
      %v852 = vpop.xlane.xlu0 %851
      %v853 = vsel %vm590, %v840, 0.0
      %854 = vadd.xlane.f32.xlu0 %v853
      %v855 = vpop.xlane.xlu0 %854
      %v856 = vsel %vm590, %v841, 0.0
      %857 = vadd.xlane.f32.xlu0 %v856
      %v858 = vpop.xlane.xlu0 %857
      %v859 = vsel %vm590, %v842, 0.0
      %860 = vadd.xlane.f32.xlu0 %v859
      %v861 = vpop.xlane.xlu0 %860
      %v862 = vsel %vm590, %v843, 0.0
      %863 = vadd.xlane.f32.xlu0 %v862
      %v864 = vpop.xlane.xlu0 %863
      %v865 = vsel %vm590, %v844, 0.0
      %866 = vadd.xlane.f32.xlu0 %v865
      %v867 = vpop.xlane.xlu0 %866
      %v868 = vsel %vm590, %v845, 0.0
      %869 = vadd.xlane.f32.xlu0 %v868
      %v870 = vpop.xlane.xlu0 %869
      %vm871 = vcmask 253952
      %v872 = vsel %vm871, %v846, 0.0
      %873 = vadd.xlane.f32.xlu0 %v872
      %v874 = vpop.xlane.xlu0 %873
      %v875 = vsub.f32 %v849, %v758
      %v876 = vsub.f32 %v852, %v761
      %v877 = vsub.f32 %v855, %v764
      %v878 = vsub.f32 %v858, %v767
      %v879 = vsub.f32 %v861, %v770
      %v880 = vsub.f32 %v864, %v773
      %v881 = vsub.f32 %v867, %v776
      %v882 = vsub.f32 %v870, %v779
      %v883 = vsub.f32 %v874, %v783
      %v884 = vmul.f32 %v875, 1.442695
      %v885 = vpow.pop %v884
      %v886 = vmul.f32 %v876, 1.442695
      %v887 = vpow.pop %v886
      %v888 = vmul.f32 %v877, 1.442695
      %v889 = vpow.pop %v888
      %v890 = vmul.f32 %v878, 1.442695
      %v891 = vpow.pop %v890
      %v892 = vmul.f32 %v879, 1.442695
      %v893 = vpow.pop %v892
      %v894 = vmul.f32 %v880, 1.442695
      %v895 = vpow.pop %v894
      %v896 = vmul.f32 %v881, 1.442695
      %v897 = vpow.pop %v896
      %v898 = vmul.f32 %v882, 1.442695
      %v899 = vpow.pop %v898
      %v900 = vmul.f32 %v883, 1.442695
      %v901 = vpow.pop %v900
      %v902 = vrcp.pop %v813
      %v903 = vrcp.pop %v816
      %v904 = vrcp.pop %v819
      %v905 = vrcp.pop %v822
      %v906 = vrcp.pop %v825
      %v907 = vrcp.pop %v828
      %v908 = vrcp.pop %v831
      %v909 = vrcp.pop %v834
      %v910 = vrcp.pop %v837
      %v911 = vmul.f32 %v885, %v902
      %v912 = vmul.f32 %v887, %v903
      %v913 = vmul.f32 %v889, %v904
      %v914 = vmul.f32 %v891, %v905
      %v915 = vmul.f32 %v893, %v906
      %v916 = vmul.f32 %v895, %v907
      %v917 = vmul.f32 %v897, %v908
      %v918 = vmul.f32 %v899, %v909
      %v919 = vmul.f32 %v901, %v910
      %920 = vrot.lane.b32.xlu0 %v428, 96
      %v921 = vpop.permute.xlu0 %920
      %922 = vrot.lane.b32.xlu0 %v434, 96
      %v923 = vpop.permute.xlu0 %922
      %924 = vrot.lane.b32.xlu0 %v440, 96
      %v925 = vpop.permute.xlu0 %924
      %926 = vrot.lane.b32.xlu0 %v446, 96
      %v927 = vpop.permute.xlu0 %926
      %928 = vrot.lane.b32.xlu0 %v452, 96
      %v929 = vpop.permute.xlu0 %928
      %930 = vrot.lane.b32.xlu0 %v458, 96
      %v931 = vpop.permute.xlu0 %930
      %932 = vrot.lane.b32.xlu0 %v464, 96
      %v933 = vpop.permute.xlu0 %932
      %934 = vrot.lane.b32.xlu0 %v470, 96
      %v935 = vpop.permute.xlu0 %934
      %936 = vrot.lane.b32.xlu0 %v476, 96
      %v937 = vpop.permute.xlu0 %936
      %938 = vrot.lane.b32.xlu0 %v430, 96
      %v939 = vpop.permute.xlu0 %938
      %940 = vrot.lane.b32.xlu0 %v436, 96
      %v941 = vpop.permute.xlu0 %940
      %942 = vrot.lane.b32.xlu0 %v442, 96
      %v943 = vpop.permute.xlu0 %942
      %944 = vrot.lane.b32.xlu0 %v448, 96
      %v945 = vpop.permute.xlu0 %944
      %946 = vrot.lane.b32.xlu0 %v454, 96
      %v947 = vpop.permute.xlu0 %946
      %948 = vrot.lane.b32.xlu0 %v460, 96
      %v949 = vpop.permute.xlu0 %948
      %950 = vrot.lane.b32.xlu0 %v466, 96
      %v951 = vpop.permute.xlu0 %950
      %952 = vrot.lane.b32.xlu0 %v472, 96
      %v953 = vpop.permute.xlu0 %952
      %954 = vrot.lane.b32.xlu0 %v478, 96
      %v955 = vpop.permute.xlu0 %954
      %v956 = vsel %vm590, %v921, 0
      %v958 = vsel %vm590, %v923, 0
      %v960 = vsel %vm590, %v925, 0
      %v962 = vsel %vm590, %v927, 0
      %v964 = vsel %vm590, %v929, 0
      %v966 = vsel %vm590, %v931, 0
      %v968 = vsel %vm590, %v933, 0
      %v970 = vsel %vm590, %v935, 0
      %v972 = vsel %vm590, %v937, 0
      %v974 = vsel %vm590, %v939, 0
      %v976 = vsel %vm590, %v941, 0
      %v978 = vsel %vm590, %v943, 0
      %v980 = vsel %vm590, %v945, 0
      %v982 = vsel %vm590, %v947, 0
      %v984 = vsel %vm590, %v949, 0
      %v986 = vsel %vm590, %v951, 0
      %v988 = vsel %vm590, %v953, 0
      %v990 = vsel %vm590, %v955, 0
      %992 = vmatprep.subr.mxu0 0.0
      %993 = vmatpush1.xpose.msra.mxu0 %v974
      %994 = vmatprep.subr.mxu0 0.0
      %995 = vmatpush1.xpose.msra.mxu0 %v976
      %996 = vmatprep.subr.mxu0 0.0
      %997 = vmatpush1.xpose.msra.mxu0 %v978
      %998 = vmatprep.subr.mxu0 0.0
      %999 = vmatpush1.xpose.msra.mxu0 %v980
      %1000 = vmatprep.subr.mxu0 0.0
      %1001 = vmatpush1.xpose.msra.mxu0 %v982
      %1002 = vmatprep.subr.mxu0 0.0
      %1003 = vmatpush1.xpose.msra.mxu0 %v984
      %1004 = vmatprep.subr.mxu0 0.0
      %1005 = vmatpush1.xpose.msra.mxu0 %v986
      %1006 = vmatprep.subr.mxu0 0.0
      %1007 = vmatpush1.xpose.msra.mxu0 %v988
      %1008 = vmatprep.subr.mxu0 0.0
      %1009 = vmatpush1.xpose.msra.mxu0 %v990
      %1010 = vmatprep.subr.mxu0 0.0
      %1011 = vmatpush1.xpose.msra.mxu0 0.0
      %1012 = vmatprep.subr.mxu0 0.0
      %1013 = vmatpush1.xpose.msra.mxu0 0.0
      %1014 = vmatprep.subr.mxu0 0.0
      %1015 = vmatpush1.xpose.msra.mxu0 0.0
      %1016 = vmatprep.subr.mxu0 0.0
      %1017 = vmatpush1.xpose.msra.mxu0 0.0
      %1018 = vmatprep.subr.mxu0 0.0
      %1019 = vmatpush1.xpose.msra.mxu0 0.0
      %1020 = vmatprep.subr.mxu0 0.0
      %1021 = vmatpush1.xpose.msra.mxu0 0.0
      %1022 = vmatprep.subr.mxu0 0.0
      %1023 = vmatpush1.xpose.msra.mxu0 0.0
      %1024 = vmatprep.subr.mxu0 0.0
      %1025 = vmatpush1.xpose.msra.mxu0 0.0
      %1026 = vmatprep.subr.mxu0 0.0
      %1027 = vmatpush1.xpose.msra.mxu0 0.0
      %1028 = vmatprep.subr.mxu0 0.0
      %1029 = vmatpush1.xpose.msra.mxu0 0.0
      %1030 = vmatprep.subr.mxu0 0.0
      %1031 = vmatpush1.xpose.msra.mxu0 0.0
      %1032 = vmatprep.subr.mxu0 0.0
      %1033 = vmatpush1.xpose.msra.mxu0 0.0
      %1034 = vmatprep.subr.mxu0 0.0
      %1035 = vmatpush1.xpose.msra.mxu0 0.0
      %1036 = vmatprep.subr.mxu0 0.0
      %1037 = vmatpush1.xpose.msra.mxu0 0.0
      %1038 = vmatprep.subr.mxu0 0.0
      %1039 = vmatpush1.xpose.msra.mxu0 0.0
      %1040 = vmatprep.subr.mxu0 0.0
      %1041 = vmatpush1.xpose.msra.mxu0 0.0
      %1042 = vmatprep.subr.mxu0 0.0
      %1043 = vmatpush1.xpose.msra.mxu0 0.0
      %1044 = vmatprep.subr.mxu0 0.0
      %1045 = vmatpush1.xpose.msra.mxu0 0.0
      %1046 = vmatprep.subr.mxu0 0.0
      %1047 = vmatpush1.xpose.msra.mxu0 0.0
      %1048 = vmatprep.subr.mxu0 0.0
      %1049 = vmatpush1.xpose.msra.mxu0 0.0
      %1050 = vmatprep.subr.mxu0 0.0
      %1051 = vmatpush1.xpose.msra.mxu0 0.0
      %1052 = vmatprep.subr.mxu0 0.0
      %1053 = vmatpush1.xpose.msra.mxu0 0.0
      %1054 = vmatprep.subr.mxu0 0.0
      %1055 = vmatpush1.xpose.msra.mxu0 0.0
      %1056 = vmatprep.mubr.f32.mxu0 0.0
      %1057 = vmatmul.mubr.f32.gmra.mrb[0].mxu0 %v956
      %v1058 = vpop.f32.mrb[0].mxu0
      %v1059 = vadd.f32 0.0, %v1058
      %v1060 = vpop.f32.mrb[0].mxu0
      %1061 = vmatprep.mubr.f32.mxu0 0.0
      %1062 = vmatmul.mubr.f32.gmra.mrb[0].mxu0 %v958
      %v1063 = vpop.f32.mrb[0].mxu0
      %v1064 = vadd.f32 0.0, %v1063
      %v1065 = vpop.f32.mrb[0].mxu0
      %1066 = vmatprep.mubr.f32.mxu0 0.0
      %1067 = vmatmul.mubr.f32.gmra.mrb[0].mxu0 %v960
      %v1068 = vpop.f32.mrb[0].mxu0
      %v1069 = vadd.f32 0.0, %v1068
      %v1070 = vpop.f32.mrb[0].mxu0
      %1071 = vmatprep.mubr.f32.mxu0 0.0
      %1072 = vmatmul.mubr.f32.gmra.mrb[0].mxu0 %v962
      %v1073 = vpop.f32.mrb[0].mxu0
      %v1074 = vadd.f32 0.0, %v1073
      %v1075 = vpop.f32.mrb[0].mxu0
      %1076 = vmatprep.mubr.f32.mxu0 0.0
      %1077 = vmatmul.mubr.f32.gmra.mrb[0].mxu0 %v964
      %v1078 = vpop.f32.mrb[0].mxu0
      %v1079 = vadd.f32 0.0, %v1078
      %v1080 = vpop.f32.mrb[0].mxu0
      %1081 = vmatprep.mubr.f32.mxu0 0.0
      %1082 = vmatmul.mubr.f32.gmra.mrb[0].mxu0 %v966
      %v1083 = vpop.f32.mrb[0].mxu0
      %v1084 = vadd.f32 0.0, %v1083
      %v1085 = vpop.f32.mrb[0].mxu0
      %1086 = vmatprep.mubr.f32.mxu0 0.0
      %1087 = vmatmul.mubr.f32.gmra.mrb[0].mxu0 %v968
      %v1088 = vpop.f32.mrb[0].mxu0
      %v1089 = vadd.f32 0.0, %v1088
      %v1090 = vpop.f32.mrb[0].mxu0
      %1091 = vmatprep.mubr.f32.mxu0 0.0
      %1092 = vmatmul.mubr.f32.gmra.mrb[0].mxu0 %v970
      %v1093 = vpop.f32.mrb[0].mxu0
      %v1094 = vadd.f32 0.0, %v1093
      %v1095 = vpop.f32.mrb[0].mxu0
      %1096 = vmatprep.mubr.f32.mxu0 0.0
      %1097 = vmatmul.mubr.f32.gmra.mrb[0].mxu0 %v972
      %v1098 = vpop.f32.mrb[0].mxu0
      %v1099 = vadd.f32 0.0, %v1098
      %v1100 = vpop.f32.mrb[0].mxu0
      %1101 = vdwg.mxu0
      %v1102 = vsel %vm755, %v1059, -inf
      %1103 = vmax.xlane.f32.xlu0 %v1102
      %v1104 = vpop.xlane.xlu0 %1103
      %v1105 = vsel %vm755, %v1064, -inf
      %1106 = vmax.xlane.f32.xlu0 %v1105
      %v1107 = vpop.xlane.xlu0 %1106
      %v1108 = vsel %vm755, %v1069, -inf
      %1109 = vmax.xlane.f32.xlu0 %v1108
      %v1110 = vpop.xlane.xlu0 %1109
      %v1111 = vsel %vm755, %v1074, -inf
      %1112 = vmax.xlane.f32.xlu0 %v1111
      %v1113 = vpop.xlane.xlu0 %1112
      %v1114 = vsel %vm755, %v1079, -inf
      %1115 = vmax.xlane.f32.xlu0 %v1114
      %v1116 = vpop.xlane.xlu0 %1115
      %v1117 = vsel %vm755, %v1084, -inf
      %1118 = vmax.xlane.f32.xlu0 %v1117
      %v1119 = vpop.xlane.xlu0 %1118
      %v1120 = vsel %vm755, %v1089, -inf
      %1121 = vmax.xlane.f32.xlu0 %v1120
      %v1122 = vpop.xlane.xlu0 %1121
      %v1123 = vsel %vm755, %v1094, -inf
      %1124 = vmax.xlane.f32.xlu0 %v1123
      %v1125 = vpop.xlane.xlu0 %1124
      %v1126 = vsel %vm780, %v1099, -inf
      %1127 = vmax.xlane.f32.xlu0 %v1126
      %v1128 = vpop.xlane.xlu0 %1127
      %v1129 = vsub.f32 %v1059, %v1104
      %v1130 = vsub.f32 %v1064, %v1107
      %v1131 = vsub.f32 %v1069, %v1110
      %v1132 = vsub.f32 %v1074, %v1113
      %v1133 = vsub.f32 %v1079, %v1116
      %v1134 = vsub.f32 %v1084, %v1119
      %v1135 = vsub.f32 %v1089, %v1122
      %v1136 = vsub.f32 %v1094, %v1125
      %v1137 = vsub.f32 %v1099, %v1128
      %v1138 = vmul.f32 %v1129, 1.442695
      %v1139 = vpow.pop %v1138
      %v1140 = vmul.f32 %v1130, 1.442695
      %v1141 = vpow.pop %v1140
      %v1142 = vmul.f32 %v1131, 1.442695
      %v1143 = vpow.pop %v1142
      %v1144 = vmul.f32 %v1132, 1.442695
      %v1145 = vpow.pop %v1144
      %v1146 = vmul.f32 %v1133, 1.442695
      %v1147 = vpow.pop %v1146
      %v1148 = vmul.f32 %v1134, 1.442695
      %v1149 = vpow.pop %v1148
      %v1150 = vmul.f32 %v1135, 1.442695
      %v1151 = vpow.pop %v1150
      %v1152 = vmul.f32 %v1136, 1.442695
      %v1153 = vpow.pop %v1152
      %v1154 = vmul.f32 %v1137, 1.442695
      %v1155 = vpow.pop %v1154
      %v1156 = vsel %vm755, %v1139, 0.0
      %1157 = vadd.xlane.f32.xlu0 %v1156
      %v1158 = vpop.xlane.xlu0 %1157
      %v1159 = vsel %vm755, %v1141, 0.0
      %1160 = vadd.xlane.f32.xlu0 %v1159
      %v1161 = vpop.xlane.xlu0 %1160
      %v1162 = vsel %vm755, %v1143, 0.0
      %1163 = vadd.xlane.f32.xlu0 %v1162
      %v1164 = vpop.xlane.xlu0 %1163
      %v1165 = vsel %vm755, %v1145, 0.0
      %1166 = vadd.xlane.f32.xlu0 %v1165
      %v1167 = vpop.xlane.xlu0 %1166
      %v1168 = vsel %vm755, %v1147, 0.0
      %1169 = vadd.xlane.f32.xlu0 %v1168
      %v1170 = vpop.xlane.xlu0 %1169
      %v1171 = vsel %vm755, %v1149, 0.0
      %1172 = vadd.xlane.f32.xlu0 %v1171
      %v1173 = vpop.xlane.xlu0 %1172
      %v1174 = vsel %vm755, %v1151, 0.0
      %1175 = vadd.xlane.f32.xlu0 %v1174
      %v1176 = vpop.xlane.xlu0 %1175
      %v1177 = vsel %vm755, %v1153, 0.0
      %1178 = vadd.xlane.f32.xlu0 %v1177
      %v1179 = vpop.xlane.xlu0 %1178
      %v1180 = vsel %vm780, %v1155, 0.0
      %1181 = vadd.xlane.f32.xlu0 %v1180
      %v1182 = vpop.xlane.xlu0 %1181
      %1192 = vrot.lane.b32.xlu0 %v838, 96
      %v1193 = vpop.permute.xlu0 %1192
      %1194 = vrot.lane.b32.xlu0 %v839, 96
      %v1195 = vpop.permute.xlu0 %1194
      %1196 = vrot.lane.b32.xlu0 %v840, 96
      %v1197 = vpop.permute.xlu0 %1196
      %1198 = vrot.lane.b32.xlu0 %v841, 96
      %v1199 = vpop.permute.xlu0 %1198
      %1200 = vrot.lane.b32.xlu0 %v842, 96
      %v1201 = vpop.permute.xlu0 %1200
      %1202 = vrot.lane.b32.xlu0 %v843, 96
      %v1203 = vpop.permute.xlu0 %1202
      %1204 = vrot.lane.b32.xlu0 %v844, 96
      %v1205 = vpop.permute.xlu0 %1204
      %1206 = vrot.lane.b32.xlu0 %v845, 96
      %v1207 = vpop.permute.xlu0 %1206
      %1208 = vrot.lane.b32.xlu0 %v846, 96
      %v1209 = vpop.permute.xlu0 %1208
      %v1219 = vsel %vm590, %v1193, 0.0
      %1220 = vadd.xlane.f32.xlu0 %v1219
      %v1221 = vpop.xlane.xlu0 %1220
      %v1222 = vsel %vm590, %v1195, 0.0
      %1223 = vadd.xlane.f32.xlu0 %v1222
      %v1224 = vpop.xlane.xlu0 %1223
      %v1225 = vsel %vm590, %v1197, 0.0
      %1226 = vadd.xlane.f32.xlu0 %v1225
      %v1227 = vpop.xlane.xlu0 %1226
      %v1228 = vsel %vm590, %v1199, 0.0
      %1229 = vadd.xlane.f32.xlu0 %v1228
      %v1230 = vpop.xlane.xlu0 %1229
      %v1231 = vsel %vm590, %v1201, 0.0
      %1232 = vadd.xlane.f32.xlu0 %v1231
      %v1233 = vpop.xlane.xlu0 %1232
      %v1234 = vsel %vm590, %v1203, 0.0
      %1235 = vadd.xlane.f32.xlu0 %v1234
      %v1236 = vpop.xlane.xlu0 %1235
      %v1237 = vsel %vm590, %v1205, 0.0
      %1238 = vadd.xlane.f32.xlu0 %v1237
      %v1239 = vpop.xlane.xlu0 %1238
      %v1240 = vsel %vm590, %v1207, 0.0
      %1241 = vadd.xlane.f32.xlu0 %v1240
      %v1242 = vpop.xlane.xlu0 %1241
      %v1243 = vsel %vm871, %v1209, 0.0
      %1244 = vadd.xlane.f32.xlu0 %v1243
      %v1245 = vpop.xlane.xlu0 %1244
      %v1246 = vsub.f32 %v1221, %v1104
      %v1247 = vsub.f32 %v1224, %v1107
      %v1248 = vsub.f32 %v1227, %v1110
      %v1249 = vsub.f32 %v1230, %v1113
      %v1250 = vsub.f32 %v1233, %v1116
      %v1251 = vsub.f32 %v1236, %v1119
      %v1252 = vsub.f32 %v1239, %v1122
      %v1253 = vsub.f32 %v1242, %v1125
      %v1254 = vsub.f32 %v1245, %v1128
      %v1255 = vmul.f32 %v1246, 1.442695
      %v1256 = vpow.pop %v1255
      %v1257 = vmul.f32 %v1247, 1.442695
      %v1258 = vpow.pop %v1257
      %v1259 = vmul.f32 %v1248, 1.442695
      %v1260 = vpow.pop %v1259
      %v1261 = vmul.f32 %v1249, 1.442695
      %v1262 = vpow.pop %v1261
      %v1263 = vmul.f32 %v1250, 1.442695
      %v1264 = vpow.pop %v1263
      %v1265 = vmul.f32 %v1251, 1.442695
      %v1266 = vpow.pop %v1265
      %v1267 = vmul.f32 %v1252, 1.442695
      %v1268 = vpow.pop %v1267
      %v1269 = vmul.f32 %v1253, 1.442695
      %v1270 = vpow.pop %v1269
      %v1271 = vmul.f32 %v1254, 1.442695
      %v1272 = vpow.pop %v1271
      %v1273 = vrcp.pop %v1158
      %v1274 = vrcp.pop %v1161
      %v1275 = vrcp.pop %v1164
      %v1276 = vrcp.pop %v1167
      %v1277 = vrcp.pop %v1170
      %v1278 = vrcp.pop %v1173
      %v1279 = vrcp.pop %v1176
      %v1280 = vrcp.pop %v1179
      %v1281 = vrcp.pop %v1182
      %v1282 = vmul.f32 %v1256, %v1273
      %v1283 = vmul.f32 %v1258, %v1274
      %v1284 = vmul.f32 %v1260, %v1275
      %v1285 = vmul.f32 %v1262, %v1276
      %v1286 = vmul.f32 %v1264, %v1277
      %v1287 = vmul.f32 %v1266, %v1278
      %v1288 = vmul.f32 %v1268, %v1279
      %v1289 = vmul.f32 %v1270, %v1280
      %v1290 = vmul.f32 %v1272, %v1281
      %1291 = vrot.lane.b32.xlu0 %v428, 64
      %v1292 = vpop.permute.xlu0 %1291
      %1293 = vrot.lane.b32.xlu0 %v434, 64
      %v1294 = vpop.permute.xlu0 %1293
      %1295 = vrot.lane.b32.xlu0 %v440, 64
      %v1296 = vpop.permute.xlu0 %1295
      %1297 = vrot.lane.b32.xlu0 %v446, 64
      %v1298 = vpop.permute.xlu0 %1297
      %1299 = vrot.lane.b32.xlu0 %v452, 64
      %v1300 = vpop.permute.xlu0 %1299
      %1301 = vrot.lane.b32.xlu0 %v458, 64
      %v1302 = vpop.permute.xlu0 %1301
      %1303 = vrot.lane.b32.xlu0 %v464, 64
      %v1304 = vpop.permute.xlu0 %1303
      %1305 = vrot.lane.b32.xlu0 %v470, 64
      %v1306 = vpop.permute.xlu0 %1305
      %1307 = vrot.lane.b32.xlu0 %v476, 64
      %v1308 = vpop.permute.xlu0 %1307
      %1309 = vrot.lane.b32.xlu0 %v430, 64
      %v1310 = vpop.permute.xlu0 %1309
      %1311 = vrot.lane.b32.xlu0 %v436, 64
      %v1312 = vpop.permute.xlu0 %1311
      %1313 = vrot.lane.b32.xlu0 %v442, 64
      %v1314 = vpop.permute.xlu0 %1313
      %1315 = vrot.lane.b32.xlu0 %v448, 64
      %v1316 = vpop.permute.xlu0 %1315
      %1317 = vrot.lane.b32.xlu0 %v454, 64
      %v1318 = vpop.permute.xlu0 %1317
      %1319 = vrot.lane.b32.xlu0 %v460, 64
      %v1320 = vpop.permute.xlu0 %1319
      %1321 = vrot.lane.b32.xlu0 %v466, 64
      %v1322 = vpop.permute.xlu0 %1321
      %1323 = vrot.lane.b32.xlu0 %v472, 64
      %v1324 = vpop.permute.xlu0 %1323
      %1325 = vrot.lane.b32.xlu0 %v478, 64
      %v1326 = vpop.permute.xlu0 %1325
      %v1327 = vsel %vm590, %v1292, 0
      %v1329 = vsel %vm590, %v1294, 0
      %v1331 = vsel %vm590, %v1296, 0
      %v1333 = vsel %vm590, %v1298, 0
      %v1335 = vsel %vm590, %v1300, 0
      %v1337 = vsel %vm590, %v1302, 0
      %v1339 = vsel %vm590, %v1304, 0
      %v1341 = vsel %vm590, %v1306, 0
      %v1343 = vsel %vm590, %v1308, 0
      %v1345 = vsel %vm590, %v1310, 0
      %v1347 = vsel %vm590, %v1312, 0
      %v1349 = vsel %vm590, %v1314, 0
      %v1351 = vsel %vm590, %v1316, 0
      %v1353 = vsel %vm590, %v1318, 0
      %v1355 = vsel %vm590, %v1320, 0
      %v1357 = vsel %vm590, %v1322, 0
      %v1359 = vsel %vm590, %v1324, 0
      %v1361 = vsel %vm590, %v1326, 0
      %1363 = vmatprep.subr.mxu0 0.0
      %1364 = vmatpush1.xpose.msra.mxu0 %v1345
      %1365 = vmatprep.subr.mxu0 0.0
      %1366 = vmatpush1.xpose.msra.mxu0 %v1347
      %1367 = vmatprep.subr.mxu0 0.0
      %1368 = vmatpush1.xpose.msra.mxu0 %v1349
      %1369 = vmatprep.subr.mxu0 0.0
      %1370 = vmatpush1.xpose.msra.mxu0 %v1351
      %1371 = vmatprep.subr.mxu0 0.0
      %1372 = vmatpush1.xpose.msra.mxu0 %v1353
      %1373 = vmatprep.subr.mxu0 0.0
      %1374 = vmatpush1.xpose.msra.mxu0 %v1355
      %1375 = vmatprep.subr.mxu0 0.0
      %1376 = vmatpush1.xpose.msra.mxu0 %v1357
      %1377 = vmatprep.subr.mxu0 0.0
      %1378 = vmatpush1.xpose.msra.mxu0 %v1359
      %1379 = vmatprep.subr.mxu0 0.0
      %1380 = vmatpush1.xpose.msra.mxu0 %v1361
      %1381 = vmatprep.subr.mxu0 0.0
      %1382 = vmatpush1.xpose.msra.mxu0 0.0
      %1383 = vmatprep.subr.mxu0 0.0
      %1384 = vmatpush1.xpose.msra.mxu0 0.0
      %1385 = vmatprep.subr.mxu0 0.0
      %1386 = vmatpush1.xpose.msra.mxu0 0.0
      %1387 = vmatprep.subr.mxu0 0.0
      %1388 = vmatpush1.xpose.msra.mxu0 0.0
      %1389 = vmatprep.subr.mxu0 0.0
      %1390 = vmatpush1.xpose.msra.mxu0 0.0
      %1391 = vmatprep.subr.mxu0 0.0
      %1392 = vmatpush1.xpose.msra.mxu0 0.0
      %1393 = vmatprep.subr.mxu0 0.0
      %1394 = vmatpush1.xpose.msra.mxu0 0.0
      %1395 = vmatprep.subr.mxu0 0.0
      %1396 = vmatpush1.xpose.msra.mxu0 0.0
      %1397 = vmatprep.subr.mxu0 0.0
      %1398 = vmatpush1.xpose.msra.mxu0 0.0
      %1399 = vmatprep.subr.mxu0 0.0
      %1400 = vmatpush1.xpose.msra.mxu0 0.0
      %1401 = vmatprep.subr.mxu0 0.0
      %1402 = vmatpush1.xpose.msra.mxu0 0.0
      %1403 = vmatprep.subr.mxu0 0.0
      %1404 = vmatpush1.xpose.msra.mxu0 0.0
      %1405 = vmatprep.subr.mxu0 0.0
      %1406 = vmatpush1.xpose.msra.mxu0 0.0
      %1407 = vmatprep.subr.mxu0 0.0
      %1408 = vmatpush1.xpose.msra.mxu0 0.0
      %1409 = vmatprep.subr.mxu0 0.0
      %1410 = vmatpush1.xpose.msra.mxu0 0.0
      %1411 = vmatprep.subr.mxu0 0.0
      %1412 = vmatpush1.xpose.msra.mxu0 0.0
      %1413 = vmatprep.subr.mxu0 0.0
      %1414 = vmatpush1.xpose.msra.mxu0 0.0
      %1415 = vmatprep.subr.mxu0 0.0
      %1416 = vmatpush1.xpose.msra.mxu0 0.0
      %1417 = vmatprep.subr.mxu0 0.0
      %1418 = vmatpush1.xpose.msra.mxu0 0.0
      %1419 = vmatprep.subr.mxu0 0.0
      %1420 = vmatpush1.xpose.msra.mxu0 0.0
      %1421 = vmatprep.subr.mxu0 0.0
      %1422 = vmatpush1.xpose.msra.mxu0 0.0
      %1423 = vmatprep.subr.mxu0 0.0
      %1424 = vmatpush1.xpose.msra.mxu0 0.0
      %1425 = vmatprep.subr.mxu0 0.0
      %1426 = vmatpush1.xpose.msra.mxu0 0.0
      %1427 = vmatprep.mubr.f32.mxu0 0.0
      %1428 = vmatmul.mubr.f32.gmra.mrb[0].mxu0 %v1327
      %v1429 = vpop.f32.mrb[0].mxu0
      %v1430 = vadd.f32 0.0, %v1429
      %v1431 = vpop.f32.mrb[0].mxu0
      %1432 = vmatprep.mubr.f32.mxu0 0.0
      %1433 = vmatmul.mubr.f32.gmra.mrb[0].mxu0 %v1329
      %v1434 = vpop.f32.mrb[0].mxu0
      %v1435 = vadd.f32 0.0, %v1434
      %v1436 = vpop.f32.mrb[0].mxu0
      %1437 = vmatprep.mubr.f32.mxu0 0.0
      %1438 = vmatmul.mubr.f32.gmra.mrb[0].mxu0 %v1331
      %v1439 = vpop.f32.mrb[0].mxu0
      %v1440 = vadd.f32 0.0, %v1439
      %v1441 = vpop.f32.mrb[0].mxu0
      %1442 = vmatprep.mubr.f32.mxu0 0.0
      %1443 = vmatmul.mubr.f32.gmra.mrb[0].mxu0 %v1333
      %v1444 = vpop.f32.mrb[0].mxu0
      %v1445 = vadd.f32 0.0, %v1444
      %v1446 = vpop.f32.mrb[0].mxu0
      %1447 = vmatprep.mubr.f32.mxu0 0.0
      %1448 = vmatmul.mubr.f32.gmra.mrb[0].mxu0 %v1335
      %v1449 = vpop.f32.mrb[0].mxu0
      %v1450 = vadd.f32 0.0, %v1449
      %v1451 = vpop.f32.mrb[0].mxu0
      %1452 = vmatprep.mubr.f32.mxu0 0.0
      %1453 = vmatmul.mubr.f32.gmra.mrb[0].mxu0 %v1337
      %v1454 = vpop.f32.mrb[0].mxu0
      %v1455 = vadd.f32 0.0, %v1454
      %v1456 = vpop.f32.mrb[0].mxu0
      %1457 = vmatprep.mubr.f32.mxu0 0.0
      %1458 = vmatmul.mubr.f32.gmra.mrb[0].mxu0 %v1339
      %v1459 = vpop.f32.mrb[0].mxu0
      %v1460 = vadd.f32 0.0, %v1459
      %v1461 = vpop.f32.mrb[0].mxu0
      %1462 = vmatprep.mubr.f32.mxu0 0.0
      %1463 = vmatmul.mubr.f32.gmra.mrb[0].mxu0 %v1341
      %v1464 = vpop.f32.mrb[0].mxu0
      %v1465 = vadd.f32 0.0, %v1464
      %v1466 = vpop.f32.mrb[0].mxu0
      %1467 = vmatprep.mubr.f32.mxu0 0.0
      %1468 = vmatmul.mubr.f32.gmra.mrb[0].mxu0 %v1343
      %v1469 = vpop.f32.mrb[0].mxu0
      %v1470 = vadd.f32 0.0, %v1469
      %v1471 = vpop.f32.mrb[0].mxu0
      %1472 = vdwg.mxu0
      %v1473 = vsel %vm755, %v1430, -inf
      %1474 = vmax.xlane.f32.xlu0 %v1473
      %v1475 = vpop.xlane.xlu0 %1474
      %v1476 = vsel %vm755, %v1435, -inf
      %1477 = vmax.xlane.f32.xlu0 %v1476
      %v1478 = vpop.xlane.xlu0 %1477
      %v1479 = vsel %vm755, %v1440, -inf
      %1480 = vmax.xlane.f32.xlu0 %v1479
      %v1481 = vpop.xlane.xlu0 %1480
      %v1482 = vsel %vm755, %v1445, -inf
      %1483 = vmax.xlane.f32.xlu0 %v1482
      %v1484 = vpop.xlane.xlu0 %1483
      %v1485 = vsel %vm755, %v1450, -inf
      %1486 = vmax.xlane.f32.xlu0 %v1485
      %v1487 = vpop.xlane.xlu0 %1486
      %v1488 = vsel %vm755, %v1455, -inf
      %1489 = vmax.xlane.f32.xlu0 %v1488
      %v1490 = vpop.xlane.xlu0 %1489
      %v1491 = vsel %vm755, %v1460, -inf
      %1492 = vmax.xlane.f32.xlu0 %v1491
      %v1493 = vpop.xlane.xlu0 %1492
      %v1494 = vsel %vm755, %v1465, -inf
      %1495 = vmax.xlane.f32.xlu0 %v1494
      %v1496 = vpop.xlane.xlu0 %1495
      %v1497 = vsel %vm780, %v1470, -inf
      %1498 = vmax.xlane.f32.xlu0 %v1497
      %v1499 = vpop.xlane.xlu0 %1498
      %v1500 = vsub.f32 %v1430, %v1475
      %v1501 = vsub.f32 %v1435, %v1478
      %v1502 = vsub.f32 %v1440, %v1481
      %v1503 = vsub.f32 %v1445, %v1484
      %v1504 = vsub.f32 %v1450, %v1487
      %v1505 = vsub.f32 %v1455, %v1490
      %v1506 = vsub.f32 %v1460, %v1493
      %v1507 = vsub.f32 %v1465, %v1496
      %v1508 = vsub.f32 %v1470, %v1499
      %v1509 = vmul.f32 %v1500, 1.442695
      %v1510 = vpow.pop %v1509
      %v1511 = vmul.f32 %v1501, 1.442695
      %v1512 = vpow.pop %v1511
      %v1513 = vmul.f32 %v1502, 1.442695
      %v1514 = vpow.pop %v1513
      %v1515 = vmul.f32 %v1503, 1.442695
      %v1516 = vpow.pop %v1515
      %v1517 = vmul.f32 %v1504, 1.442695
      %v1518 = vpow.pop %v1517
      %v1519 = vmul.f32 %v1505, 1.442695
      %v1520 = vpow.pop %v1519
      %v1521 = vmul.f32 %v1506, 1.442695
      %v1522 = vpow.pop %v1521
      %v1523 = vmul.f32 %v1507, 1.442695
      %v1524 = vpow.pop %v1523
      %v1525 = vmul.f32 %v1508, 1.442695
      %v1526 = vpow.pop %v1525
      %v1527 = vsel %vm755, %v1510, 0.0
      %1528 = vadd.xlane.f32.xlu0 %v1527
      %v1529 = vpop.xlane.xlu0 %1528
      %v1530 = vsel %vm755, %v1512, 0.0
      %1531 = vadd.xlane.f32.xlu0 %v1530
      %v1532 = vpop.xlane.xlu0 %1531
      %v1533 = vsel %vm755, %v1514, 0.0
      %1534 = vadd.xlane.f32.xlu0 %v1533
      %v1535 = vpop.xlane.xlu0 %1534
      %v1536 = vsel %vm755, %v1516, 0.0
      %1537 = vadd.xlane.f32.xlu0 %v1536
      %v1538 = vpop.xlane.xlu0 %1537
      %v1539 = vsel %vm755, %v1518, 0.0
      %1540 = vadd.xlane.f32.xlu0 %v1539
      %v1541 = vpop.xlane.xlu0 %1540
      %v1542 = vsel %vm755, %v1520, 0.0
      %1543 = vadd.xlane.f32.xlu0 %v1542
      %v1544 = vpop.xlane.xlu0 %1543
      %v1545 = vsel %vm755, %v1522, 0.0
      %1546 = vadd.xlane.f32.xlu0 %v1545
      %v1547 = vpop.xlane.xlu0 %1546
      %v1548 = vsel %vm755, %v1524, 0.0
      %1549 = vadd.xlane.f32.xlu0 %v1548
      %v1550 = vpop.xlane.xlu0 %1549
      %v1551 = vsel %vm780, %v1526, 0.0
      %1552 = vadd.xlane.f32.xlu0 %v1551
      %v1553 = vpop.xlane.xlu0 %1552
      %1554 = vrot.lane.b32.xlu0 %v838, 64
      %v1555 = vpop.permute.xlu0 %1554
      %1556 = vrot.lane.b32.xlu0 %v839, 64
      %v1557 = vpop.permute.xlu0 %1556
      %1558 = vrot.lane.b32.xlu0 %v840, 64
      %v1559 = vpop.permute.xlu0 %1558
      %1560 = vrot.lane.b32.xlu0 %v841, 64
      %v1561 = vpop.permute.xlu0 %1560
      %1562 = vrot.lane.b32.xlu0 %v842, 64
      %v1563 = vpop.permute.xlu0 %1562
      %1564 = vrot.lane.b32.xlu0 %v843, 64
      %v1565 = vpop.permute.xlu0 %1564
      %1566 = vrot.lane.b32.xlu0 %v844, 64
      %v1567 = vpop.permute.xlu0 %1566
      %1568 = vrot.lane.b32.xlu0 %v845, 64
      %v1569 = vpop.permute.xlu0 %1568
      %1570 = vrot.lane.b32.xlu0 %v846, 64
      %v1571 = vpop.permute.xlu0 %1570
      %v1581 = vsel %vm590, %v1555, 0.0
      %1582 = vadd.xlane.f32.xlu0 %v1581
      %v1583 = vpop.xlane.xlu0 %1582
      %v1584 = vsel %vm590, %v1557, 0.0
      %1585 = vadd.xlane.f32.xlu0 %v1584
      %v1586 = vpop.xlane.xlu0 %1585
      %v1587 = vsel %vm590, %v1559, 0.0
      %1588 = vadd.xlane.f32.xlu0 %v1587
      %v1589 = vpop.xlane.xlu0 %1588
      %v1590 = vsel %vm590, %v1561, 0.0
      %1591 = vadd.xlane.f32.xlu0 %v1590
      %v1592 = vpop.xlane.xlu0 %1591
      %v1593 = vsel %vm590, %v1563, 0.0
      %1594 = vadd.xlane.f32.xlu0 %v1593
      %v1595 = vpop.xlane.xlu0 %1594
      %v1596 = vsel %vm590, %v1565, 0.0
      %1597 = vadd.xlane.f32.xlu0 %v1596
      %v1598 = vpop.xlane.xlu0 %1597
      %v1599 = vsel %vm590, %v1567, 0.0
      %1600 = vadd.xlane.f32.xlu0 %v1599
      %v1601 = vpop.xlane.xlu0 %1600
      %v1602 = vsel %vm590, %v1569, 0.0
      %1603 = vadd.xlane.f32.xlu0 %v1602
      %v1604 = vpop.xlane.xlu0 %1603
      %v1605 = vsel %vm871, %v1571, 0.0
      %1606 = vadd.xlane.f32.xlu0 %v1605
      %v1607 = vpop.xlane.xlu0 %1606
      %v1608 = vsub.f32 %v1583, %v1475
      %v1609 = vsub.f32 %v1586, %v1478
      %v1610 = vsub.f32 %v1589, %v1481
      %v1611 = vsub.f32 %v1592, %v1484
      %v1612 = vsub.f32 %v1595, %v1487
      %v1613 = vsub.f32 %v1598, %v1490
      %v1614 = vsub.f32 %v1601, %v1493
      %v1615 = vsub.f32 %v1604, %v1496
      %v1616 = vsub.f32 %v1607, %v1499
      %v1617 = vmul.f32 %v1608, 1.442695
      %v1618 = vpow.pop %v1617
      %v1619 = vmul.f32 %v1609, 1.442695
      %v1620 = vpow.pop %v1619
      %v1621 = vmul.f32 %v1610, 1.442695
      %v1622 = vpow.pop %v1621
      %v1623 = vmul.f32 %v1611, 1.442695
      %v1624 = vpow.pop %v1623
      %v1625 = vmul.f32 %v1612, 1.442695
      %v1626 = vpow.pop %v1625
      %v1627 = vmul.f32 %v1613, 1.442695
      %v1628 = vpow.pop %v1627
      %v1629 = vmul.f32 %v1614, 1.442695
      %v1630 = vpow.pop %v1629
      %v1631 = vmul.f32 %v1615, 1.442695
      %v1632 = vpow.pop %v1631
      %v1633 = vmul.f32 %v1616, 1.442695
      %v1634 = vpow.pop %v1633
      %v1635 = vrcp.pop %v1529
      %v1636 = vrcp.pop %v1532
      %v1637 = vrcp.pop %v1535
      %v1638 = vrcp.pop %v1538
      %v1639 = vrcp.pop %v1541
      %v1640 = vrcp.pop %v1544
      %v1641 = vrcp.pop %v1547
      %v1642 = vrcp.pop %v1550
      %v1643 = vrcp.pop %v1553
      %v1644 = vmul.f32 %v1618, %v1635
      %v1645 = vmul.f32 %v1620, %v1636
      %v1646 = vmul.f32 %v1622, %v1637
      %v1647 = vmul.f32 %v1624, %v1638
      %v1648 = vmul.f32 %v1626, %v1639
      %v1649 = vmul.f32 %v1628, %v1640
      %v1650 = vmul.f32 %v1630, %v1641
      %v1651 = vmul.f32 %v1632, %v1642
      %v1652 = vmul.f32 %v1634, %v1643
      %1653 = vrot.lane.b32.xlu0 %v428, 32
      %v1654 = vpop.permute.xlu0 %1653
      %1655 = vrot.lane.b32.xlu0 %v434, 32
      %v1656 = vpop.permute.xlu0 %1655
      %1657 = vrot.lane.b32.xlu0 %v440, 32
      %v1658 = vpop.permute.xlu0 %1657
      %1659 = vrot.lane.b32.xlu0 %v446, 32
      %v1660 = vpop.permute.xlu0 %1659
      %1661 = vrot.lane.b32.xlu0 %v452, 32
      %v1662 = vpop.permute.xlu0 %1661
      %1663 = vrot.lane.b32.xlu0 %v458, 32
      %v1664 = vpop.permute.xlu0 %1663
      %1665 = vrot.lane.b32.xlu0 %v464, 32
      %v1666 = vpop.permute.xlu0 %1665
      %1667 = vrot.lane.b32.xlu0 %v470, 32
      %v1668 = vpop.permute.xlu0 %1667
      %1669 = vrot.lane.b32.xlu0 %v476, 32
      %v1670 = vpop.permute.xlu0 %1669
      %1671 = vrot.lane.b32.xlu0 %v430, 32
      %v1672 = vpop.permute.xlu0 %1671
      %1673 = vrot.lane.b32.xlu0 %v436, 32
      %v1674 = vpop.permute.xlu0 %1673
      %1675 = vrot.lane.b32.xlu0 %v442, 32
      %v1676 = vpop.permute.xlu0 %1675
      %1677 = vrot.lane.b32.xlu0 %v448, 32
      %v1678 = vpop.permute.xlu0 %1677
      %1679 = vrot.lane.b32.xlu0 %v454, 32
      %v1680 = vpop.permute.xlu0 %1679
      %1681 = vrot.lane.b32.xlu0 %v460, 32
      %v1682 = vpop.permute.xlu0 %1681
      %1683 = vrot.lane.b32.xlu0 %v466, 32
      %v1684 = vpop.permute.xlu0 %1683
      %1685 = vrot.lane.b32.xlu0 %v472, 32
      %v1686 = vpop.permute.xlu0 %1685
      %1687 = vrot.lane.b32.xlu0 %v478, 32
      %v1688 = vpop.permute.xlu0 %1687
      %v1689 = vsel %vm590, %v1654, 0
      %v1691 = vsel %vm590, %v1656, 0
      %v1693 = vsel %vm590, %v1658, 0
      %v1695 = vsel %vm590, %v1660, 0
      %v1697 = vsel %vm590, %v1662, 0
      %v1699 = vsel %vm590, %v1664, 0
      %v1701 = vsel %vm590, %v1666, 0
      %v1703 = vsel %vm590, %v1668, 0
      %v1705 = vsel %vm590, %v1670, 0
      %v1707 = vsel %vm590, %v1672, 0
      %v1709 = vsel %vm590, %v1674, 0
      %v1711 = vsel %vm590, %v1676, 0
      %v1713 = vsel %vm590, %v1678, 0
      %v1715 = vsel %vm590, %v1680, 0
      %v1717 = vsel %vm590, %v1682, 0
      %v1719 = vsel %vm590, %v1684, 0
      %v1721 = vsel %vm590, %v1686, 0
      %v1723 = vsel %vm590, %v1688, 0
      %1725 = vmatprep.subr.mxu0 0.0
      %1726 = vmatpush1.xpose.msra.mxu0 %v1707
      %1727 = vmatprep.subr.mxu0 0.0
      %1728 = vmatpush1.xpose.msra.mxu0 %v1709
      %1729 = vmatprep.subr.mxu0 0.0
      %1730 = vmatpush1.xpose.msra.mxu0 %v1711
      %1731 = vmatprep.subr.mxu0 0.0
      %1732 = vmatpush1.xpose.msra.mxu0 %v1713
      %1733 = vmatprep.subr.mxu0 0.0
      %1734 = vmatpush1.xpose.msra.mxu0 %v1715
      %1735 = vmatprep.subr.mxu0 0.0
      %1736 = vmatpush1.xpose.msra.mxu0 %v1717
      %1737 = vmatprep.subr.mxu0 0.0
      %1738 = vmatpush1.xpose.msra.mxu0 %v1719
      %1739 = vmatprep.subr.mxu0 0.0
      %1740 = vmatpush1.xpose.msra.mxu0 %v1721
      %1741 = vmatprep.subr.mxu0 0.0
      %1742 = vmatpush1.xpose.msra.mxu0 %v1723
      %1743 = vmatprep.subr.mxu0 0.0
      %1744 = vmatpush1.xpose.msra.mxu0 0.0
      %1745 = vmatprep.subr.mxu0 0.0
      %1746 = vmatpush1.xpose.msra.mxu0 0.0
      %1747 = vmatprep.subr.mxu0 0.0
      %1748 = vmatpush1.xpose.msra.mxu0 0.0
      %1749 = vmatprep.subr.mxu0 0.0
      %1750 = vmatpush1.xpose.msra.mxu0 0.0
      %1751 = vmatprep.subr.mxu0 0.0
      %1752 = vmatpush1.xpose.msra.mxu0 0.0
      %1753 = vmatprep.subr.mxu0 0.0
      %1754 = vmatpush1.xpose.msra.mxu0 0.0
      %1755 = vmatprep.subr.mxu0 0.0
      %1756 = vmatpush1.xpose.msra.mxu0 0.0
      %1757 = vmatprep.subr.mxu0 0.0
      %1758 = vmatpush1.xpose.msra.mxu0 0.0
      %1759 = vmatprep.subr.mxu0 0.0
      %1760 = vmatpush1.xpose.msra.mxu0 0.0
      %1761 = vmatprep.subr.mxu0 0.0
      %1762 = vmatpush1.xpose.msra.mxu0 0.0
      %1763 = vmatprep.subr.mxu0 0.0
      %1764 = vmatpush1.xpose.msra.mxu0 0.0
      %1765 = vmatprep.subr.mxu0 0.0
      %1766 = vmatpush1.xpose.msra.mxu0 0.0
      %1767 = vmatprep.subr.mxu0 0.0
      %1768 = vmatpush1.xpose.msra.mxu0 0.0
      %1769 = vmatprep.subr.mxu0 0.0
      %1770 = vmatpush1.xpose.msra.mxu0 0.0
      %1771 = vmatprep.subr.mxu0 0.0
      %1772 = vmatpush1.xpose.msra.mxu0 0.0
      %1773 = vmatprep.subr.mxu0 0.0
      %1774 = vmatpush1.xpose.msra.mxu0 0.0
      %1775 = vmatprep.subr.mxu0 0.0
      %1776 = vmatpush1.xpose.msra.mxu0 0.0
      %1777 = vmatprep.subr.mxu0 0.0
      %1778 = vmatpush1.xpose.msra.mxu0 0.0
      %1779 = vmatprep.subr.mxu0 0.0
      %1780 = vmatpush1.xpose.msra.mxu0 0.0
      %1781 = vmatprep.subr.mxu0 0.0
      %1782 = vmatpush1.xpose.msra.mxu0 0.0
      %1783 = vmatprep.subr.mxu0 0.0
      %1784 = vmatpush1.xpose.msra.mxu0 0.0
      %1785 = vmatprep.subr.mxu0 0.0
      %1786 = vmatpush1.xpose.msra.mxu0 0.0
      %1787 = vmatprep.subr.mxu0 0.0
      %1788 = vmatpush1.xpose.msra.mxu0 0.0
      %1789 = vmatprep.mubr.f32.mxu0 0.0
      %1790 = vmatmul.mubr.f32.gmra.mrb[0].mxu0 %v1689
      %v1791 = vpop.f32.mrb[0].mxu0
      %v1792 = vadd.f32 0.0, %v1791
      %v1793 = vpop.f32.mrb[0].mxu0
      %1794 = vmatprep.mubr.f32.mxu0 0.0
      %1795 = vmatmul.mubr.f32.gmra.mrb[0].mxu0 %v1691
      %v1796 = vpop.f32.mrb[0].mxu0
      %v1797 = vadd.f32 0.0, %v1796
      %v1798 = vpop.f32.mrb[0].mxu0
      %1799 = vmatprep.mubr.f32.mxu0 0.0
      %1800 = vmatmul.mubr.f32.gmra.mrb[0].mxu0 %v1693
      %v1801 = vpop.f32.mrb[0].mxu0
      %v1802 = vadd.f32 0.0, %v1801
      %v1803 = vpop.f32.mrb[0].mxu0
      %1804 = vmatprep.mubr.f32.mxu0 0.0
      %1805 = vmatmul.mubr.f32.gmra.mrb[0].mxu0 %v1695
      %v1806 = vpop.f32.mrb[0].mxu0
      %v1807 = vadd.f32 0.0, %v1806
      %v1808 = vpop.f32.mrb[0].mxu0
      %1809 = vmatprep.mubr.f32.mxu0 0.0
      %1810 = vmatmul.mubr.f32.gmra.mrb[0].mxu0 %v1697
      %v1811 = vpop.f32.mrb[0].mxu0
      %v1812 = vadd.f32 0.0, %v1811
      %v1813 = vpop.f32.mrb[0].mxu0
      %1814 = vmatprep.mubr.f32.mxu0 0.0
      %1815 = vmatmul.mubr.f32.gmra.mrb[0].mxu0 %v1699
      %v1816 = vpop.f32.mrb[0].mxu0
      %v1817 = vadd.f32 0.0, %v1816
      %v1818 = vpop.f32.mrb[0].mxu0
      %1819 = vmatprep.mubr.f32.mxu0 0.0
      %1820 = vmatmul.mubr.f32.gmra.mrb[0].mxu0 %v1701
      %v1821 = vpop.f32.mrb[0].mxu0
      %v1822 = vadd.f32 0.0, %v1821
      %v1823 = vpop.f32.mrb[0].mxu0
      %1824 = vmatprep.mubr.f32.mxu0 0.0
      %1825 = vmatmul.mubr.f32.gmra.mrb[0].mxu0 %v1703
      %v1826 = vpop.f32.mrb[0].mxu0
      %v1827 = vadd.f32 0.0, %v1826
      %v1828 = vpop.f32.mrb[0].mxu0
      %1829 = vmatprep.mubr.f32.mxu0 0.0
      %1830 = vmatmul.mubr.f32.gmra.mrb[0].mxu0 %v1705
      %v1831 = vpop.f32.mrb[0].mxu0
      %v1832 = vadd.f32 0.0, %v1831
      %v1833 = vpop.f32.mrb[0].mxu0
      %1834 = vdwg.mxu0
      %v1835 = vsel %vm755, %v1792, -inf
      %1836 = vmax.xlane.f32.xlu0 %v1835
      %v1837 = vpop.xlane.xlu0 %1836
      %v1838 = vsel %vm755, %v1797, -inf
      %1839 = vmax.xlane.f32.xlu0 %v1838
      %v1840 = vpop.xlane.xlu0 %1839
      %v1841 = vsel %vm755, %v1802, -inf
      %1842 = vmax.xlane.f32.xlu0 %v1841
      %v1843 = vpop.xlane.xlu0 %1842
      %v1844 = vsel %vm755, %v1807, -inf
      %1845 = vmax.xlane.f32.xlu0 %v1844
      %v1846 = vpop.xlane.xlu0 %1845
      %v1847 = vsel %vm755, %v1812, -inf
      %1848 = vmax.xlane.f32.xlu0 %v1847
      %v1849 = vpop.xlane.xlu0 %1848
      %v1850 = vsel %vm755, %v1817, -inf
      %1851 = vmax.xlane.f32.xlu0 %v1850
      %v1852 = vpop.xlane.xlu0 %1851
      %v1853 = vsel %vm755, %v1822, -inf
      %1854 = vmax.xlane.f32.xlu0 %v1853
      %v1855 = vpop.xlane.xlu0 %1854
      %v1856 = vsel %vm755, %v1827, -inf
      %1857 = vmax.xlane.f32.xlu0 %v1856
      %v1858 = vpop.xlane.xlu0 %1857
      %v1859 = vsel %vm780, %v1832, -inf
      %1860 = vmax.xlane.f32.xlu0 %v1859
      %v1861 = vpop.xlane.xlu0 %1860
      %v1862 = vsub.f32 %v1792, %v1837
      %v1863 = vsub.f32 %v1797, %v1840
      %v1864 = vsub.f32 %v1802, %v1843
      %v1865 = vsub.f32 %v1807, %v1846
      %v1866 = vsub.f32 %v1812, %v1849
      %v1867 = vsub.f32 %v1817, %v1852
      %v1868 = vsub.f32 %v1822, %v1855
      %v1869 = vsub.f32 %v1827, %v1858
      %v1870 = vsub.f32 %v1832, %v1861
      %v1871 = vmul.f32 %v1862, 1.442695
      %v1872 = vpow.pop %v1871
      %v1873 = vmul.f32 %v1863, 1.442695
      %v1874 = vpow.pop %v1873
      %v1875 = vmul.f32 %v1864, 1.442695
      %v1876 = vpow.pop %v1875
      %v1877 = vmul.f32 %v1865, 1.442695
      %v1878 = vpow.pop %v1877
      %v1879 = vmul.f32 %v1866, 1.442695
      %v1880 = vpow.pop %v1879
      %v1881 = vmul.f32 %v1867, 1.442695
      %v1882 = vpow.pop %v1881
      %v1883 = vmul.f32 %v1868, 1.442695
      %v1884 = vpow.pop %v1883
      %v1885 = vmul.f32 %v1869, 1.442695
      %v1886 = vpow.pop %v1885
      %v1887 = vmul.f32 %v1870, 1.442695
      %v1888 = vpow.pop %v1887
      %v1889 = vsel %vm755, %v1872, 0.0
      %1890 = vadd.xlane.f32.xlu0 %v1889
      %v1891 = vpop.xlane.xlu0 %1890
      %v1892 = vsel %vm755, %v1874, 0.0
      %1893 = vadd.xlane.f32.xlu0 %v1892
      %v1894 = vpop.xlane.xlu0 %1893
      %v1895 = vsel %vm755, %v1876, 0.0
      %1896 = vadd.xlane.f32.xlu0 %v1895
      %v1897 = vpop.xlane.xlu0 %1896
      %v1898 = vsel %vm755, %v1878, 0.0
      %1899 = vadd.xlane.f32.xlu0 %v1898
      %v1900 = vpop.xlane.xlu0 %1899
      %v1901 = vsel %vm755, %v1880, 0.0
      %1902 = vadd.xlane.f32.xlu0 %v1901
      %v1903 = vpop.xlane.xlu0 %1902
      %v1904 = vsel %vm755, %v1882, 0.0
      %1905 = vadd.xlane.f32.xlu0 %v1904
      %v1906 = vpop.xlane.xlu0 %1905
      %v1907 = vsel %vm755, %v1884, 0.0
      %1908 = vadd.xlane.f32.xlu0 %v1907
      %v1909 = vpop.xlane.xlu0 %1908
      %v1910 = vsel %vm755, %v1886, 0.0
      %1911 = vadd.xlane.f32.xlu0 %v1910
      %v1912 = vpop.xlane.xlu0 %1911
      %v1913 = vsel %vm780, %v1888, 0.0
      %1914 = vadd.xlane.f32.xlu0 %v1913
      %v1915 = vpop.xlane.xlu0 %1914
      %1916 = vrot.lane.b32.xlu0 %v838, 32
      %v1917 = vpop.permute.xlu0 %1916
      %1918 = vrot.lane.b32.xlu0 %v839, 32
      %v1919 = vpop.permute.xlu0 %1918
      %1920 = vrot.lane.b32.xlu0 %v840, 32
      %v1921 = vpop.permute.xlu0 %1920
      %1922 = vrot.lane.b32.xlu0 %v841, 32
      %v1923 = vpop.permute.xlu0 %1922
      %1924 = vrot.lane.b32.xlu0 %v842, 32
      %v1925 = vpop.permute.xlu0 %1924
      %1926 = vrot.lane.b32.xlu0 %v843, 32
      %v1927 = vpop.permute.xlu0 %1926
      %1928 = vrot.lane.b32.xlu0 %v844, 32
      %v1929 = vpop.permute.xlu0 %1928
      %1930 = vrot.lane.b32.xlu0 %v845, 32
      %v1931 = vpop.permute.xlu0 %1930
      %1932 = vrot.lane.b32.xlu0 %v846, 32
      %v1933 = vpop.permute.xlu0 %1932
      %v1943 = vsel %vm590, %v1917, 0.0
      %1944 = vadd.xlane.f32.xlu0 %v1943
      %v1945 = vpop.xlane.xlu0 %1944
      %v1946 = vsel %vm590, %v1919, 0.0
      %1947 = vadd.xlane.f32.xlu0 %v1946
      %v1948 = vpop.xlane.xlu0 %1947
      %v1949 = vsel %vm590, %v1921, 0.0
      %1950 = vadd.xlane.f32.xlu0 %v1949
      %v1951 = vpop.xlane.xlu0 %1950
      %v1952 = vsel %vm590, %v1923, 0.0
      %1953 = vadd.xlane.f32.xlu0 %v1952
      %v1954 = vpop.xlane.xlu0 %1953
      %v1955 = vsel %vm590, %v1925, 0.0
      %1956 = vadd.xlane.f32.xlu0 %v1955
      %v1957 = vpop.xlane.xlu0 %1956
      %v1958 = vsel %vm590, %v1927, 0.0
      %1959 = vadd.xlane.f32.xlu0 %v1958
      %v1960 = vpop.xlane.xlu0 %1959
      %v1961 = vsel %vm590, %v1929, 0.0
      %1962 = vadd.xlane.f32.xlu0 %v1961
      %v1963 = vpop.xlane.xlu0 %1962
      %v1964 = vsel %vm590, %v1931, 0.0
      %1965 = vadd.xlane.f32.xlu0 %v1964
      %v1966 = vpop.xlane.xlu0 %1965
      %v1967 = vsel %vm871, %v1933, 0.0
      %1968 = vadd.xlane.f32.xlu0 %v1967
      %v1969 = vpop.xlane.xlu0 %1968
      %v1970 = vsub.f32 %v1945, %v1837
      %v1971 = vsub.f32 %v1948, %v1840
      %v1972 = vsub.f32 %v1951, %v1843
      %v1973 = vsub.f32 %v1954, %v1846
      %v1974 = vsub.f32 %v1957, %v1849
      %v1975 = vsub.f32 %v1960, %v1852
      %v1976 = vsub.f32 %v1963, %v1855
      %v1977 = vsub.f32 %v1966, %v1858
      %v1978 = vsub.f32 %v1969, %v1861
      %v1979 = vmul.f32 %v1970, 1.442695
      %v1980 = vpow.pop %v1979
      %v1981 = vmul.f32 %v1971, 1.442695
      %v1982 = vpow.pop %v1981
      %v1983 = vmul.f32 %v1972, 1.442695
      %v1984 = vpow.pop %v1983
      %v1985 = vmul.f32 %v1973, 1.442695
      %v1986 = vpow.pop %v1985
      %v1987 = vmul.f32 %v1974, 1.442695
      %v1988 = vpow.pop %v1987
      %v1989 = vmul.f32 %v1975, 1.442695
      %v1990 = vpow.pop %v1989
      %v1991 = vmul.f32 %v1976, 1.442695
      %v1992 = vpow.pop %v1991
      %v1993 = vmul.f32 %v1977, 1.442695
      %v1994 = vpow.pop %v1993
      %v1995 = vmul.f32 %v1978, 1.442695
      %v1996 = vpow.pop %v1995
      %v1997 = vrcp.pop %v1891
      %v1998 = vrcp.pop %v1894
      %v1999 = vrcp.pop %v1897
      %v2000 = vrcp.pop %v1900
      %v2001 = vrcp.pop %v1903
      %v2002 = vrcp.pop %v1906
      %v2003 = vrcp.pop %v1909
      %v2004 = vrcp.pop %v1912
      %v2005 = vrcp.pop %v1915
      %v2006 = vmul.f32 %v1980, %v1997
      %v2007 = vmul.f32 %v1982, %v1998
      %v2008 = vmul.f32 %v1984, %v1999
      %v2009 = vmul.f32 %v1986, %v2000
      %v2010 = vmul.f32 %v1988, %v2001
      %v2011 = vmul.f32 %v1990, %v2002
      %v2012 = vmul.f32 %v1992, %v2003
      %v2013 = vmul.f32 %v1994, %v2004
      %v2014 = vmul.f32 %v1996, %v2005
      %v2015 = vsel %vm590, %v911, %v1282
      %v2016 = vsel %vm590, %v912, %v1283
      %v2017 = vsel %vm590, %v913, %v1284
      %v2018 = vsel %vm590, %v914, %v1285
      %v2019 = vsel %vm590, %v915, %v1286
      %v2020 = vsel %vm590, %v916, %v1287
      %v2021 = vsel %vm590, %v917, %v1288
      %v2022 = vsel %vm590, %v918, %v1289
      %v2023 = vsel %vm590, %v919, %v1290
      %vm2024 = vcmask 523264
      %v2025 = vsel %vm2024, %v2015, %v1644
      %v2026 = vsel %vm2024, %v2016, %v1645
      %v2027 = vsel %vm2024, %v2017, %v1646
      %v2028 = vsel %vm2024, %v2018, %v1647
      %v2029 = vsel %vm2024, %v2019, %v1648
      %v2030 = vsel %vm2024, %v2020, %v1649
      %v2031 = vsel %vm2024, %v2021, %v1650
      %v2032 = vsel %vm2024, %v2022, %v1651
      %v2033 = vsel %vm2024, %v2023, %v1652
      %vm2034 = vcmask 785408
      %v2035 = vsel %vm2034, %v2025, %v2006
      %v2036 = vsel %vm2034, %v2026, %v2007
      %v2037 = vsel %vm2034, %v2027, %v2008
      %v2038 = vsel %vm2034, %v2028, %v2009
      %v2039 = vsel %vm2034, %v2029, %v2010
      %v2040 = vsel %vm2034, %v2030, %v2011
      %v2041 = vsel %vm2034, %v2031, %v2012
      %v2042 = vsel %vm2034, %v2032, %v2013
      %v2043 = vsel %vm2034, %v2033, %v2014
      %v2044 = vmul.f32 %v2035, %v547
      %v2045 = vmul.f32 %v2036, %v552
      %v2046 = vmul.f32 %v2037, %v557
      %v2047 = vmul.f32 %v2038, %v562
      %v2048 = vmul.f32 %v2039, %v567
      %v2049 = vmul.f32 %v2040, %v572
      %v2050 = vmul.f32 %v2041, %v577
      %v2051 = vmul.f32 %v2042, %v582
      %v2052 = vmul.f32 %v2043, %v587
      %v2053 = vld [vmem:[%s4] sm:$0xff]
      %v2054 = vld [vmem:[%s4 + $0x8] sm:$0xff]
      %v2055 = vld [vmem:[%s4 + $0x10] sm:$0xff]
      %v2056 = vld [vmem:[%s4 + $0x18] sm:$0xff]
      %v2057 = vld [vmem:[%s4 + $0x20] sm:$0xff]
      %v2058 = vld [vmem:[%s4 + $0x28] sm:$0xff]
      %v2059 = vld [vmem:[%s4 + $0x30] sm:$0xff]
      %v2060 = vld [vmem:[%s4 + $0x38] sm:$0xff]
      %v2061 = vld [vmem:[%s4 + $0x40] sm:$0xff]
      %v2062 = vld [vmem:[%s4 + $0x48] sm:$0xff]
      %v2063 = vld [vmem:[%s4 + $0x50] sm:$0xff]
      %v2064 = vld [vmem:[%s4 + $0x58] sm:$0xff]
      %v2065 = vld [vmem:[%s4 + $0x60] sm:$0xff]
      %v2066 = vld [vmem:[%s4 + $0x68] sm:$0xff]
      %v2067 = vld [vmem:[%s4 + $0x70] sm:$0xff]
      %v2068 = vld [vmem:[%s4 + $0x78] sm:$0xff]
      %2069 = vmatprep.subr.mxu0 0.0
      %2070 = vmatpush1.msra.mxu0 %v2053
      %2071 = vmatprep.subr.mxu0 0.0
      %2072 = vmatpush1.msra.mxu0 %v2054
      %2073 = vmatprep.subr.mxu0 0.0
      %2074 = vmatpush1.msra.mxu0 %v2055
      %2075 = vmatprep.subr.mxu0 0.0
      %2076 = vmatpush1.msra.mxu0 %v2056
      %2077 = vmatprep.subr.mxu0 0.0
      %2078 = vmatpush1.msra.mxu0 %v2057
      %2079 = vmatprep.subr.mxu0 0.0
      %2080 = vmatpush1.msra.mxu0 %v2058
      %2081 = vmatprep.subr.mxu0 0.0
      %2082 = vmatpush1.msra.mxu0 %v2059
      %2083 = vmatprep.subr.mxu0 0.0
      %2084 = vmatpush1.msra.mxu0 %v2060
      %2085 = vmatprep.subr.mxu0 0.0
      %2086 = vmatpush1.msra.mxu0 %v2061
      %2087 = vmatprep.subr.mxu0 0.0
      %2088 = vmatpush1.msra.mxu0 %v2062
      %2089 = vmatprep.subr.mxu0 0.0
      %2090 = vmatpush1.msra.mxu0 %v2063
      %2091 = vmatprep.subr.mxu0 0.0
      %2092 = vmatpush1.msra.mxu0 %v2064
      %2093 = vmatprep.subr.mxu0 0.0
      %2094 = vmatpush1.msra.mxu0 %v2065
      %2095 = vmatprep.subr.mxu0 0.0
      %2096 = vmatpush1.msra.mxu0 %v2066
      %2097 = vmatprep.subr.mxu0 0.0
      %2098 = vmatpush1.msra.mxu0 %v2067
      %2099 = vmatprep.subr.mxu0 0.0
      %2100 = vmatpush1.msra.mxu0 %v2068
      %2101 = vmatprep.subr.mxu0 0.0
      %2102 = vmatpush1.msra.mxu0 0.0
      %2103 = vmatprep.subr.mxu0 0.0
      %2104 = vmatpush1.msra.mxu0 0.0
      %2105 = vmatprep.subr.mxu0 0.0
      %2106 = vmatpush1.msra.mxu0 0.0
      %2107 = vmatprep.subr.mxu0 0.0
      %2108 = vmatpush1.msra.mxu0 0.0
      %2109 = vmatprep.subr.mxu0 0.0
      %2110 = vmatpush1.msra.mxu0 0.0
      %2111 = vmatprep.subr.mxu0 0.0
      %2112 = vmatpush1.msra.mxu0 0.0
      %2113 = vmatprep.subr.mxu0 0.0
      %2114 = vmatpush1.msra.mxu0 0.0
      %2115 = vmatprep.subr.mxu0 0.0
      %2116 = vmatpush1.msra.mxu0 0.0
      %2117 = vmatprep.subr.mxu0 0.0
      %2118 = vmatpush1.msra.mxu0 0.0
      %2119 = vmatprep.subr.mxu0 0.0
      %2120 = vmatpush1.msra.mxu0 0.0
      %2121 = vmatprep.subr.mxu0 0.0
      %2122 = vmatpush1.msra.mxu0 0.0
      %2123 = vmatprep.subr.mxu0 0.0
      %2124 = vmatpush1.msra.mxu0 0.0
      %2125 = vmatprep.subr.mxu0 0.0
      %2126 = vmatpush1.msra.mxu0 0.0
      %2127 = vmatprep.subr.mxu0 0.0
      %2128 = vmatpush1.msra.mxu0 0.0
      %2129 = vmatprep.subr.mxu0 0.0
      %2130 = vmatpush1.msra.mxu0 0.0
      %2131 = vmatprep.subr.mxu0 0.0
      %2132 = vmatpush1.msra.mxu0 0.0
      %2133 = vmatprep.mubr.f32.mxu0 0.0
      %2134 = vmatmul.mubr.f32.gmra.mrb[0].mxu0 %v2044
      %v2135 = vpop.f32.mrb[0].mxu0
      %v2136 = vadd.f32 0.0, %v2135
      %v2137 = vpop.f32.mrb[0].mxu0
      %2138 = vmatprep.mubr.f32.mxu0 0.0
      %2139 = vmatmul.mubr.f32.gmra.mrb[0].mxu0 %v2045
      %v2140 = vpop.f32.mrb[0].mxu0
      %v2141 = vadd.f32 0.0, %v2140
      %v2142 = vpop.f32.mrb[0].mxu0
      %2143 = vmatprep.mubr.f32.mxu0 0.0
      %2144 = vmatmul.mubr.f32.gmra.mrb[0].mxu0 %v2046
      %v2145 = vpop.f32.mrb[0].mxu0
      %v2146 = vadd.f32 0.0, %v2145
      %v2147 = vpop.f32.mrb[0].mxu0
      %2148 = vmatprep.mubr.f32.mxu0 0.0
      %2149 = vmatmul.mubr.f32.gmra.mrb[0].mxu0 %v2047
      %v2150 = vpop.f32.mrb[0].mxu0
      %v2151 = vadd.f32 0.0, %v2150
      %v2152 = vpop.f32.mrb[0].mxu0
      %2153 = vmatprep.mubr.f32.mxu0 0.0
      %2154 = vmatmul.mubr.f32.gmra.mrb[0].mxu0 %v2048
      %v2155 = vpop.f32.mrb[0].mxu0
      %v2156 = vadd.f32 0.0, %v2155
      %v2157 = vpop.f32.mrb[0].mxu0
      %2158 = vmatprep.mubr.f32.mxu0 0.0
      %2159 = vmatmul.mubr.f32.gmra.mrb[0].mxu0 %v2049
      %v2160 = vpop.f32.mrb[0].mxu0
      %v2161 = vadd.f32 0.0, %v2160
      %v2162 = vpop.f32.mrb[0].mxu0
      %2163 = vmatprep.mubr.f32.mxu0 0.0
      %2164 = vmatmul.mubr.f32.gmra.mrb[0].mxu0 %v2050
      %v2165 = vpop.f32.mrb[0].mxu0
      %v2166 = vadd.f32 0.0, %v2165
      %v2167 = vpop.f32.mrb[0].mxu0
      %2168 = vmatprep.mubr.f32.mxu0 0.0
      %2169 = vmatmul.mubr.f32.gmra.mrb[0].mxu0 %v2051
      %v2170 = vpop.f32.mrb[0].mxu0
      %v2171 = vadd.f32 0.0, %v2170
      %v2172 = vpop.f32.mrb[0].mxu0
      %2173 = vmatprep.mubr.f32.mxu0 0.0
      %2174 = vmatmul.mubr.f32.gmra.mrb[0].mxu0 %v2052
      %v2175 = vpop.f32.mrb[0].mxu0
      %v2176 = vadd.f32 0.0, %v2175
      %v2177 = vpop.f32.mrb[0].mxu0
      %2178 = vdwg.mxu0
      %2188 = vrot.lane.b32.xlu0 %v304, 64
      %v2189 = vpop.permute.xlu0 %2188
      %2190 = vrot.lane.b32.xlu0 %v305, 64
      %v2191 = vpop.permute.xlu0 %2190
      %2192 = vrot.lane.b32.xlu0 %v306, 64
      %v2193 = vpop.permute.xlu0 %2192
      %2194 = vrot.lane.b32.xlu0 %v307, 64
      %v2195 = vpop.permute.xlu0 %2194
      %2196 = vrot.lane.b32.xlu0 %v308, 64
      %v2197 = vpop.permute.xlu0 %2196
      %2198 = vrot.lane.b32.xlu0 %v309, 64
      %v2199 = vpop.permute.xlu0 %2198
      %2200 = vrot.lane.b32.xlu0 %v310, 64
      %v2201 = vpop.permute.xlu0 %2200
      %2202 = vrot.lane.b32.xlu0 %v311, 64
      %v2203 = vpop.permute.xlu0 %2202
      %2204 = vrot.lane.b32.xlu0 %v312, 64
      %v2205 = vpop.permute.xlu0 %2204
      %v2215 = vsel %vm590, %v2136, %v2189
      %v2216 = vsel %vm590, %v2141, %v2191
      %v2217 = vsel %vm590, %v2146, %v2193
      %v2218 = vsel %vm590, %v2151, %v2195
      %v2219 = vsel %vm590, %v2156, %v2197
      %v2220 = vsel %vm590, %v2161, %v2199
      %v2221 = vsel %vm590, %v2166, %v2201
      %v2222 = vsel %vm590, %v2171, %v2203
      %v2223 = vsel %vm590, %v2176, %v2205
      %v2224 = vsel %vm2024, %v2215, 0.0
      %v2225 = vsel %vm2024, %v2216, 0.0
      %v2226 = vsel %vm2024, %v2217, 0.0
      %v2227 = vsel %vm2024, %v2218, 0.0
      %v2228 = vsel %vm2024, %v2219, 0.0
      %v2229 = vsel %vm2024, %v2220, 0.0
      %v2230 = vsel %vm2024, %v2221, 0.0
      %v2231 = vsel %vm2024, %v2222, 0.0
      %v2232 = vsel %vm2024, %v2223, 0.0
      %2233 = vst [vmem:[%s224] sm:$0xff] %v2224
      %2234 = vst [vmem:[%s224 + $0x8] sm:$0xff] %v2225
      %2235 = vst [vmem:[%s224 + $0x10] sm:$0xff] %v2226
      %2236 = vst [vmem:[%s224 + $0x18] sm:$0xff] %v2227
      %2237 = vst [vmem:[%s224 + $0x20] sm:$0xff] %v2228
      %2238 = vst [vmem:[%s224 + $0x28] sm:$0xff] %v2229
      %2239 = vst [vmem:[%s224 + $0x30] sm:$0xff] %v2230
      %2240 = vst [vmem:[%s224 + $0x38] sm:$0xff] %v2231
      %2241 = vst [vmem:[%s224 + $0x40] sm:$0x1] %v2232
      %p2242 = scmp.lt.s32.totalorder %s16, 1
      %s2243 = scalar_select %p2242, %s16, 1
      %s2244 = smul.addr %s2243, 9
      %s2245 = smul.addr %s2244, 8
      %s2246 = scalar_lea.vmem %s5, %s2245
      // Predicated region
      $region41: #{multi_headed_attention.1} parent=39 // pred_check
        %p2247 = pneg %p144
      $region42: #{multi_headed_attention.1} parent=39 // pred_check_branch
        %2249 = sbr.rel (%p2247) target = $region44
      $region43: #{multi_headed_attention.1} parent=39 // pred_region
        _
      $region44: #{multi_headed_attention.1} parent=39 // pred_fallthru
        _
    $region40: #{multi_headed_attention.1} parent=5 // pred_fallthru
      _
    %p2250 = scmp.le.s32.totalorder 2, %s11
    // Predicated region
    $region45: #{multi_headed_attention.1} parent=5 // pred_check
      %p2251 = pneg %p2250
    $region46: #{multi_headed_attention.1} parent=5 // pred_check_branch
      %2253 = sbr.rel (%p2251) target = $region48
    $region47: #{multi_headed_attention.1} parent=5 // pred_region
      %s2254 = ssub.s32 %s11, 2
      // Predicated region
      $region49: #{multi_headed_attention.1} parent=47 // pred_check
        %p2255 = pneg %p150
      $region50: #{multi_headed_attention.1} parent=47 // pred_check_branch
        %2257 = sbr.rel (%p2255) target = $region52
      $region51: #{multi_headed_attention.1} parent=47 // pred_region
        %p2258 = scmp.lt.s32.totalorder %s17, 1
        %s2259 = scalar_select %p2258, %s17, 1
        %s2260 = smul.addr %s2259, 9
        %s2261 = smul.addr %s2260, 8
        %s2262 = scalar_lea.vmem %s5, %s2261
      $region52: #{multi_headed_attention.1} parent=47 // pred_fallthru
        _
    $region48: #{multi_headed_attention.1} parent=5 // pred_fallthru
      _
  $region6: #{multi_headed_attention.1} parent=0 // loop_footer
    %s15 = sadd.s32 1, %s11
  $region7: #{multi_headed_attention.1} parent=0 // loop_footer_branch
    %10 = sbr.rel target = $region3
  $region8: #{multi_headed_attention.1} parent=0 // loop_exit
    _

</llo_original>
